<compile_context>
chip_gen: v6e
topology: v6e:2x2x1
jax: 0.10.0
libtpu: 0.0.40
codegen_flags: <defaults>
</compile_context>

<pallas_src>
import numpy as np
import jax
import jax.numpy as jnp
from jax import lax
from jax.experimental import pallas as pl
from jax.experimental.pallas import tpu as pltpu

STATE_DIM = 51            # implied by forward(): concat(state[:, :49], plan, state[:, 49:51])
PLAN_FEATS = 49           # 7x7 cropped plan
FEAT_PAD = 64             # state / plan feature dims zero-padded to an aligned K for fc_1
HIDDEN_SIZE = 32
GATES = 4 * HIDDEN_SIZE   # 128 == one full lane vreg
OUT_SIZE = 8


# ----------------------------- fused kernel --------------------------------

def _make_qnet_kernel(bsize, time_step, bpad):
    """Builds the fused kernel with B, T and the padded batch baked in (static / unrolled)."""
    B, T, BP = bsize, time_step, bpad
    H, G = HIDDEN_SIZE, GATES
    bf16, f32 = jnp.bfloat16, jnp.float32

    def kernel(xs_ref, xp_ref, w1s_ref, w1p_ref, w2_ref, w3_ref, wih_ref,
               wsm_ref, bias_ref, hc0_ref, q_ref, h_ref, c_ref):
        # packed biases (all slice offsets are multiples of 128 lanes -> tile-aligned views)
        b1 = bias_ref[:, 0:128]
        b2 = bias_ref[:, 128:384]
        b3 = bias_ref[:, 384:896]
        bl = bias_ref[:, 896:1024]       # folded (b_ih + b_hh), sigmoid lanes pre-scaled by 0.5
        bh = bias_ref[:, 1024:1152]      # fused [b_adv | b_val | 0 ...]

        # ---- fused 3-layer MLP over all (T*BP) rows (bf16 operands, f32 accumulate) ----
        xs = xs_ref[...].astype(bf16)                                    # (T*BP, 64) state feats
        xp = xp_ref[...].astype(bf16)                                    # (T*BP, 64) plan feats
        h1 = jnp.maximum(
            jnp.dot(xs, w1s_ref[...], preferred_element_type=f32)
            + jnp.dot(xp, w1p_ref[...], preferred_element_type=f32) + b1, 0.0)
        h2 = jnp.maximum(jnp.dot(h1.astype(bf16), w2_ref[...],
                                 preferred_element_type=f32) + b2, 0.0)
        h3 = jnp.maximum(jnp.dot(h2.astype(bf16), w3_ref[...],
                                 preferred_element_type=f32) + b3, 0.0)

        # ---- LSTM input projection hoisted out of the recurrence ----
        gx = jnp.dot(h3.astype(bf16), wih_ref[...],
                     preferred_element_type=f32) + bl                    # (T*BP, 128)

        whh = wsm_ref[0]     # (128,128) bf16: rows [0:H] = w_hh (gate-prescaled), rows [H:] = 0
        whead = wsm_ref[1]   # (128,128) bf16: rows [0:H] = [w_adv | w_val | 0], rows [H:] = 0

        # single-tanh gate activation: sigmoid(z) = 0.5*tanh(z/2) + 0.5 (the z/2 is folded
        # into the i/f/o weight columns at pack time)
        lane = lax.broadcasted_iota(jnp.int32, (BP, G), 1)
        is_g = (lane >= 2 * H) & (lane < 3 * H)
        post_scale = jnp.where(is_g, 1.0, 0.5)
        post_off = jnp.where(is_g, 0.0, 0.5)

        # ---- recurrence: aligned (BP,128) slabs, one tanh + one tiny bf16 matmul per step;
        #      gate recombination via XLU lane rotations instead of 32-lane slices ----
        h = hc0_ref[0]       # (BP, 128) f32; valid data in rows [0:B], lanes [0:H]
        c = hc0_ref[1]
        for t in range(T):
            gates = gx[t * BP:(t + 1) * BP, :] + jnp.dot(
                h.astype(bf16), whh, preferred_element_type=f32)         # (BP, 128)
            a = jnp.tanh(gates) * post_scale + post_off                  # [i | f | g | o]
            ig = a * pltpu.roll(a, shift=2 * H, axis=1)                  # lanes [0:H] = i*g
            f_al = pltpu.roll(a, shift=3 * H, axis=1)                    # lanes [0:H] = f
            o_al = pltpu.roll(a, shift=H, axis=1)                        # lanes [0:H] = o
            c = f_al * c + ig
            h = o_al * jnp.tanh(c)

        # ---- fused dueling head (out = final hidden state of the single-layer LSTM) ----
        head = jnp.dot(h.astype(bf16), whead, preferred_element_type=f32) + bh   # (BP, 128)
        adv = head[:B, 0:OUT_SIZE]
        val = head[:B, OUT_SIZE:OUT_SIZE + 1]
        q_ref[...] = val + (adv - jnp.mean(adv, axis=1, keepdims=True))
        h_ref[...] = h[:B, 0:H]
        c_ref[...] = c[:B, 0:H]

    return kernel


# ----------------------------- wrapper --------------------------------------

def q_net_forward(params, state, cropped_plan, bsize, time_step, hidden_state, cell_state):
    B, T = bsize, time_step
    BP = max(8, ((B + 7) // 8) * 8)      # pad LSTM batch to the 8-row sublane tile
    H = HIDDEN_SIZE

    s = state.reshape(B, T, STATE_DIM)
    cp = cropped_plan.reshape(B, T, PLAN_FEATS)

    def tm_pad(a, feat):
        # (B, T, F) -> time-major (T*BP, FEAT_PAD); row = t*BP + b
        a = jnp.transpose(a, (1, 0, 2))
        a = jnp.pad(a, ((0, 0), (0, BP - B), (0, FEAT_PAD - feat)))
        return a.reshape(T * BP, FEAT_PAD)

    xs = tm_pad(s, STATE_DIM)
    xp = tm_pad(cp, PLAN_FEATS)

    h0 = jnp.pad(hidden_state[0], ((0, BP - B), (0, GATES - H)))    # (BP, 128)
    c0 = jnp.pad(cell_state[0], ((0, BP - B), (0, GATES - H)))
    hc0 = jnp.stack([h0, c0])                                       # (2, BP, 128)

    vmem = pl.BlockSpec(memory_space=pltpu.MemorySpace.VMEM)
    n_in = 10
    q, h_n, c_n = pl.pallas_call(
        _make_qnet_kernel(B, T, BP),
        out_shape=(jax.ShapeDtypeStruct((B, OUT_SIZE), jnp.float32),
                   jax.ShapeDtypeStruct((B, H), jnp.float32),
                   jax.ShapeDtypeStruct((B, H), jnp.float32)),
        in_specs=[vmem] * n_in,
        out_specs=(vmem, vmem, vmem),
        compiler_params=pltpu.CompilerParams(allow_input_fusion=[True] * n_in),
    )(xs, xp, params['w1s'], params['w1p'], params['w2'], params['w3'],
      params['w_ih'], params['w_small'], params['bias_pack'], hc0)

    return q, (h_n[None], c_n[None])   # (h_n, c_n) in PyTorch (1, B, H) convention


# --------------------------- deterministic init ------------------------------

def init_raw_params(key):
    ks = jax.random.split(key, 9)

    def xavier(k, din, dout):
        gain = np.sqrt(2.0)                     # relu gain, as in the PyTorch module
        bound = gain * np.sqrt(6.0 / (din + dout))
        return jax.random.uniform(k, (din, dout), jnp.float32, -bound, bound)

    klstm = 1.0 / np.sqrt(HIDDEN_SIZE)
    u = lambda k, shape: jax.random.uniform(k, shape, jnp.float32, -klstm, klstm)

    return dict(
        w1=xavier(ks[0], STATE_DIM + PLAN_FEATS, 128), b1=jnp.zeros((1, 128), jnp.float32),
        w2=xavier(ks[1], 128, 256), b2=jnp.zeros((1, 256), jnp.float32),
        w3=xavier(ks[2], 256, 512), b3=jnp.zeros((1, 512), jnp.float32),
        w_ih=u(ks[3], (512, GATES)), w_hh=u(ks[4], (HIDDEN_SIZE, GATES)),
        b_ih=u(ks[5], (1, GATES)), b_hh=u(ks[6], (1, GATES)),
        w_adv=xavier(ks[7], HIDDEN_SIZE, OUT_SIZE), b_adv=jnp.zeros((1, OUT_SIZE), jnp.float32),
        w_val=xavier(ks[8], HIDDEN_SIZE, 1), b_val=jnp.zeros((1, 1), jnp.float32),
    )


def pack_params(raw):
    """Transform math-convention f32 params into kernel-ready packed operands."""
    H, G = HIDDEN_SIZE, GATES
    bf16 = jnp.bfloat16

    # fold the x/2 of sigmoid(x) = 0.5*tanh(x/2) + 0.5 into the i/f/o gate columns
    col = np.arange(G)
    pre = jnp.asarray(np.where((col >= 2 * H) & (col < 3 * H), 1.0, 0.5), jnp.float32)

    # split fc_1 so the kernel consumes state and plan directly (no concat / lane pad):
    #   input_data = [state[:, :49], plan, state[:, 49:51]]
    w1 = raw['w1']                                            # (100, 128)
    w1s = jnp.concatenate([w1[:49], w1[98:100]], axis=0)      # rows for state features 0..50
    w1p = w1[49:98]                                           # rows for the 49 plan features
    w1s = jnp.pad(w1s, ((0, FEAT_PAD - STATE_DIM), (0, 0)))
    w1p = jnp.pad(w1p, ((0, FEAT_PAD - PLAN_FEATS), (0, 0)))

    w_ih = raw['w_ih'] * pre[None, :]
    w_hh = jnp.zeros((G, G), jnp.float32).at[:H].set(raw['w_hh'] * pre[None, :])
    b_lstm = (raw['b_ih'] + raw['b_hh']) * pre[None, :]       # LSTM adds both biases

    # fused dueling head: columns [0:8] = adv, column [8] = val; rows [H:] zero
    w_head = jnp.zeros((G, G), jnp.float32)
    w_head = w_head.at[:H, :OUT_SIZE].set(raw['w_adv'])
    w_head = w_head.at[:H, OUT_SIZE:OUT_SIZE + 1].set(raw['w_val'])
    b_head = jnp.zeros((1, G), jnp.float32)
    b_head = b_head.at[:, :OUT_SIZE].set(raw['b_adv'])
    b_head = b_head.at[:, OUT_SIZE:OUT_SIZE + 1].set(raw['b_val'])

    bias_pack = jnp.concatenate(
        [raw['b1'], raw['b2'], raw['b3'], b_lstm, b_head], axis=1)       # (1, 1152)

    return dict(
        w1s=w1s.astype(bf16), w1p=w1p.astype(bf16),
        w2=raw['w2'].astype(bf16), w3=raw['w3'].astype(bf16),
        w_ih=w_ih.astype(bf16),
        w_small=jnp.stack([w_hh, w_head]).astype(bf16),                  # (2, 128, 128)
        bias_pack=bias_pack,
    )


# --------------------------------- main --------------------------------------

if __name__ == "__main__":
    key = jax.random.PRNGKey(0)
    kp, ksa, kcp = jax.random.split(key, 3)
    params = pack_params(init_raw_params(kp))

    bsize, time_step = 2, 8
    state = jax.random.normal(ksa, (bsize, time_step, STATE_DIM), jnp.float32)
    cropped_plan = jax.random.normal(kcp, (bsize, time_step, 7, 7), jnp.float32)
    hidden_state = jnp.zeros((1, bsize, HIDDEN_SIZE), jnp.float32)   # init_hidden_states
    cell_state = jnp.zeros((1, bsize, HIDDEN_SIZE), jnp.float32)

    fwd = jax.jit(q_net_forward, static_argnums=(3, 4))
    qout, (h_n, c_n) = fwd(params, state, cropped_plan,
                           bsize, time_step, hidden_state, cell_state)
    jax.block_until_ready((qout, h_n, c_n))

    assert qout.shape == (bsize, OUT_SIZE)
    assert h_n.shape == (1, bsize, HIDDEN_SIZE)
    assert c_n.shape == (1, bsize, HIDDEN_SIZE)
    print("KERNEL_OK")
</pallas_src>

<mosaic_0001>
module attributes {stable_mosaic.version = 11 : i64} {
  func.func @kernel(%arg0: memref<64x64xf32, #tpu.memory_space<vmem>>, %arg1: memref<64x64xf32, #tpu.memory_space<vmem>>, %arg2: memref<64x128xbf16, #tpu.memory_space<vmem>>, %arg3: memref<64x128xbf16, #tpu.memory_space<vmem>>, %arg4: memref<128x256xbf16, #tpu.memory_space<vmem>>, %arg5: memref<256x512xbf16, #tpu.memory_space<vmem>>, %arg6: memref<512x128xbf16, #tpu.memory_space<vmem>>, %arg7: memref<2x128x128xbf16, #tpu.memory_space<vmem>>, %arg8: memref<1x1152xf32, #tpu.memory_space<vmem>>, %arg9: memref<2x8x128xf32, #tpu.memory_space<vmem>>, %arg10: memref<2x8xf32, #tpu.memory_space<vmem>>, %arg11: memref<2x32xf32, #tpu.memory_space<vmem>>, %arg12: memref<2x32xf32, #tpu.memory_space<vmem>>) attributes {dimension_semantics = [], scalar_prefetch = 0 : i64, scratch_operands = 0 : i64, tpu.core_type = #tpu.core_type<tc>} {
    %c0 = arith.constant 0 : index
    %c0_0 = arith.constant 0 : index
    %0 = vector.load %arg8[%c0, %c0_0] : memref<1x1152xf32, #tpu.memory_space<vmem>>, vector<1x128xf32>
    %c0_1 = arith.constant 0 : index
    %c128 = arith.constant 128 : index
    %1 = vector.load %arg8[%c0_1, %c128] : memref<1x1152xf32, #tpu.memory_space<vmem>>, vector<1x256xf32>
    %c0_2 = arith.constant 0 : index
    %c384 = arith.constant 384 : index
    %2 = vector.load %arg8[%c0_2, %c384] : memref<1x1152xf32, #tpu.memory_space<vmem>>, vector<1x512xf32>
    %c0_3 = arith.constant 0 : index
    %c896 = arith.constant 896 : index
    %3 = vector.load %arg8[%c0_3, %c896] : memref<1x1152xf32, #tpu.memory_space<vmem>>, vector<1x128xf32>
    %c0_4 = arith.constant 0 : index
    %c1024 = arith.constant 1024 : index
    %4 = vector.load %arg8[%c0_4, %c1024] : memref<1x1152xf32, #tpu.memory_space<vmem>>, vector<1x128xf32>
    %c0_5 = arith.constant 0 : index
    %c0_6 = arith.constant 0 : index
    %5 = vector.load %arg0[%c0_5, %c0_6] : memref<64x64xf32, #tpu.memory_space<vmem>>, vector<64x64xf32>
    %6 = arith.truncf %5 : vector<64x64xf32> to vector<64x64xbf16>
    %c0_7 = arith.constant 0 : index
    %c0_8 = arith.constant 0 : index
    %7 = vector.load %arg1[%c0_7, %c0_8] : memref<64x64xf32, #tpu.memory_space<vmem>>, vector<64x64xf32>
    %8 = arith.truncf %7 : vector<64x64xf32> to vector<64x64xbf16>
    %c0_9 = arith.constant 0 : index
    %c0_10 = arith.constant 0 : index
    %9 = vector.load %arg2[%c0_9, %c0_10] : memref<64x128xbf16, #tpu.memory_space<vmem>>, vector<64x128xbf16>
    %cst = arith.constant dense<0.000000e+00> : vector<64x128xf32>
    %10 = tpu.matmul %6, %9, %cst {dimension_numbers = #tpu.dot_dimension_numbers<[1], [0], [0], [1], [0, 0, 1, 1], [], []>} : vector<64x64xbf16>, vector<64x128xbf16>, vector<64x128xf32> -> vector<64x128xf32>
    %c0_11 = arith.constant 0 : index
    %c0_12 = arith.constant 0 : index
    %11 = vector.load %arg3[%c0_11, %c0_12] : memref<64x128xbf16, #tpu.memory_space<vmem>>, vector<64x128xbf16>
    %cst_13 = arith.constant dense<0.000000e+00> : vector<64x128xf32>
    %12 = tpu.matmul %8, %11, %cst_13 {dimension_numbers = #tpu.dot_dimension_numbers<[1], [0], [0], [1], [0, 0, 1, 1], [], []>} : vector<64x64xbf16>, vector<64x128xbf16>, vector<64x128xf32> -> vector<64x128xf32>
    %13 = arith.addf %10, %12 : vector<64x128xf32>
    %14 = vector.broadcast %0 : vector<1x128xf32> to vector<64x128xf32>
    %15 = arith.addf %13, %14 : vector<64x128xf32>
    %cst_14 = arith.constant 0.000000e+00 : f32
    %16 = vector.broadcast %cst_14 : f32 to vector<64x128xf32>
    %17 = arith.maximumf %15, %16 : vector<64x128xf32>
    %18 = arith.truncf %17 : vector<64x128xf32> to vector<64x128xbf16>
    %c0_15 = arith.constant 0 : index
    %c0_16 = arith.constant 0 : index
    %19 = vector.load %arg4[%c0_15, %c0_16] : memref<128x256xbf16, #tpu.memory_space<vmem>>, vector<128x256xbf16>
    %cst_17 = arith.constant dense<0.000000e+00> : vector<64x256xf32>
    %20 = tpu.matmul %18, %19, %cst_17 {dimension_numbers = #tpu.dot_dimension_numbers<[1], [0], [0], [1], [0, 0, 1, 1], [], []>} : vector<64x128xbf16>, vector<128x256xbf16>, vector<64x256xf32> -> vector<64x256xf32>
    %21 = vector.broadcast %1 : vector<1x256xf32> to vector<64x256xf32>
    %22 = arith.addf %20, %21 : vector<64x256xf32>
    %cst_18 = arith.constant 0.000000e+00 : f32
    %23 = vector.broadcast %cst_18 : f32 to vector<64x256xf32>
    %24 = arith.maximumf %22, %23 : vector<64x256xf32>
    %25 = arith.truncf %24 : vector<64x256xf32> to vector<64x256xbf16>
    %c0_19 = arith.constant 0 : index
    %c0_20 = arith.constant 0 : index
    %26 = vector.load %arg5[%c0_19, %c0_20] : memref<256x512xbf16, #tpu.memory_space<vmem>>, vector<256x512xbf16>
    %cst_21 = arith.constant dense<0.000000e+00> : vector<64x512xf32>
    %27 = tpu.matmul %25, %26, %cst_21 {dimension_numbers = #tpu.dot_dimension_numbers<[1], [0], [0], [1], [0, 0, 1, 1], [], []>} : vector<64x256xbf16>, vector<256x512xbf16>, vector<64x512xf32> -> vector<64x512xf32>
    %28 = vector.broadcast %2 : vector<1x512xf32> to vector<64x512xf32>
    %29 = arith.addf %27, %28 : vector<64x512xf32>
    %cst_22 = arith.constant 0.000000e+00 : f32
    %30 = vector.broadcast %cst_22 : f32 to vector<64x512xf32>
    %31 = arith.maximumf %29, %30 : vector<64x512xf32>
    %32 = arith.truncf %31 : vector<64x512xf32> to vector<64x512xbf16>
    %c0_23 = arith.constant 0 : index
    %c0_24 = arith.constant 0 : index
    %33 = vector.load %arg6[%c0_23, %c0_24] : memref<512x128xbf16, #tpu.memory_space<vmem>>, vector<512x128xbf16>
    %cst_25 = arith.constant dense<0.000000e+00> : vector<64x128xf32>
    %34 = tpu.matmul %32, %33, %cst_25 {dimension_numbers = #tpu.dot_dimension_numbers<[1], [0], [0], [1], [0, 0, 1, 1], [], []>} : vector<64x512xbf16>, vector<512x128xbf16>, vector<64x128xf32> -> vector<64x128xf32>
    %35 = vector.broadcast %3 : vector<1x128xf32> to vector<64x128xf32>
    %36 = arith.addf %34, %35 : vector<64x128xf32>
    %c0_26 = arith.constant 0 : index
    %c0_27 = arith.constant 0 : index
    %c0_28 = arith.constant 0 : index
    %37 = vector.load %arg7[%c0_26, %c0_27, %c0_28] : memref<2x128x128xbf16, #tpu.memory_space<vmem>>, vector<1x128x128xbf16>
    %38 = vector.shape_cast %37 : vector<1x128x128xbf16> to vector<128x128xbf16>
    %c1 = arith.constant 1 : index
    %c0_29 = arith.constant 0 : index
    %c0_30 = arith.constant 0 : index
    %39 = vector.load %arg7[%c1, %c0_29, %c0_30] : memref<2x128x128xbf16, #tpu.memory_space<vmem>>, vector<1x128x128xbf16>
    %40 = vector.shape_cast %39 : vector<1x128x128xbf16> to vector<128x128xbf16>
    %41 = tpu.iota {dimensions = array<i32: 1>} : vector<8x128xi32>
    %c64_i32 = arith.constant 64 : i32
    %42 = vector.broadcast %c64_i32 : i32 to vector<8x128xi32>
    %43 = arith.cmpi sge, %41, %42 : vector<8x128xi32>
    %c96_i32 = arith.constant 96 : i32
    %44 = vector.broadcast %c96_i32 : i32 to vector<8x128xi32>
    %45 = arith.cmpi slt, %41, %44 : vector<8x128xi32>
    %46 = arith.andi %43, %45 : vector<8x128xi1>
    %cst_31 = arith.constant 1.000000e+00 : f32
    %cst_32 = arith.constant 5.000000e-01 : f32
    %47 = vector.broadcast %cst_31 : f32 to vector<8x128xf32>
    %48 = vector.broadcast %cst_32 : f32 to vector<8x128xf32>
    %49 = arith.select %46, %47, %48 : vector<8x128xi1>, vector<8x128xf32>
    %cst_33 = arith.constant 0.000000e+00 : f32
    %cst_34 = arith.constant 5.000000e-01 : f32
    %50 = vector.broadcast %cst_33 : f32 to vector<8x128xf32>
    %51 = vector.broadcast %cst_34 : f32 to vector<8x128xf32>
    %52 = arith.select %46, %50, %51 : vector<8x128xi1>, vector<8x128xf32>
    %c0_35 = arith.constant 0 : index
    %c0_36 = arith.constant 0 : index
    %c0_37 = arith.constant 0 : index
    %53 = vector.load %arg9[%c0_35, %c0_36, %c0_37] : memref<2x8x128xf32, #tpu.memory_space<vmem>>, vector<1x8x128xf32>
    %54 = vector.shape_cast %53 : vector<1x8x128xf32> to vector<8x128xf32>
    %c1_38 = arith.constant 1 : index
    %c0_39 = arith.constant 0 : index
    %c0_40 = arith.constant 0 : index
    %55 = vector.load %arg9[%c1_38, %c0_39, %c0_40] : memref<2x8x128xf32, #tpu.memory_space<vmem>>, vector<1x8x128xf32>
    %56 = vector.shape_cast %55 : vector<1x8x128xf32> to vector<8x128xf32>
    %57 = vector.extract_strided_slice %36 {offsets = [0, 0], sizes = [8, 128], strides = [1, 1]} : vector<64x128xf32> to vector<8x128xf32>
    %58 = arith.truncf %54 : vector<8x128xf32> to vector<8x128xbf16>
    %cst_41 = arith.constant dense<0.000000e+00> : vector<8x128xf32>
    %59 = tpu.matmul %58, %38, %cst_41 {dimension_numbers = #tpu.dot_dimension_numbers<[1], [0], [0], [1], [0, 0, 1, 1], [], []>} : vector<8x128xbf16>, vector<128x128xbf16>, vector<8x128xf32> -> vector<8x128xf32>
    %60 = arith.addf %57, %59 : vector<8x128xf32>
    %61 = math.tanh %60 : vector<8x128xf32>
    %62 = arith.mulf %61, %49 : vector<8x128xf32>
    %63 = arith.addf %62, %52 : vector<8x128xf32>
    %c64_i32_42 = arith.constant 64 : i32
    %64 = tpu.dynamic_rotate %63 by %c64_i32_42 dim 1 : vector<8x128xf32>, i32 -> vector<8x128xf32>
    %65 = arith.mulf %63, %64 : vector<8x128xf32>
    %c96_i32_43 = arith.constant 96 : i32
    %66 = tpu.dynamic_rotate %63 by %c96_i32_43 dim 1 : vector<8x128xf32>, i32 -> vector<8x128xf32>
    %c32_i32 = arith.constant 32 : i32
    %67 = tpu.dynamic_rotate %63 by %c32_i32 dim 1 : vector<8x128xf32>, i32 -> vector<8x128xf32>
    %68 = arith.mulf %66, %56 : vector<8x128xf32>
    %69 = arith.addf %68, %65 : vector<8x128xf32>
    %70 = math.tanh %69 : vector<8x128xf32>
    %71 = arith.mulf %67, %70 : vector<8x128xf32>
    %72 = vector.extract_strided_slice %36 {offsets = [8, 0], sizes = [8, 128], strides = [1, 1]} : vector<64x128xf32> to vector<8x128xf32>
    %73 = arith.truncf %71 : vector<8x128xf32> to vector<8x128xbf16>
    %cst_44 = arith.constant dense<0.000000e+00> : vector<8x128xf32>
    %74 = tpu.matmul %73, %38, %cst_44 {dimension_numbers = #tpu.dot_dimension_numbers<[1], [0], [0], [1], [0, 0, 1, 1], [], []>} : vector<8x128xbf16>, vector<128x128xbf16>, vector<8x128xf32> -> vector<8x128xf32>
    %75 = arith.addf %72, %74 : vector<8x128xf32>
    %76 = math.tanh %75 : vector<8x128xf32>
    %77 = arith.mulf %76, %49 : vector<8x128xf32>
    %78 = arith.addf %77, %52 : vector<8x128xf32>
    %c64_i32_45 = arith.constant 64 : i32
    %79 = tpu.dynamic_rotate %78 by %c64_i32_45 dim 1 : vector<8x128xf32>, i32 -> vector<8x128xf32>
    %80 = arith.mulf %78, %79 : vector<8x128xf32>
    %c96_i32_46 = arith.constant 96 : i32
    %81 = tpu.dynamic_rotate %78 by %c96_i32_46 dim 1 : vector<8x128xf32>, i32 -> vector<8x128xf32>
    %c32_i32_47 = arith.constant 32 : i32
    %82 = tpu.dynamic_rotate %78 by %c32_i32_47 dim 1 : vector<8x128xf32>, i32 -> vector<8x128xf32>
    %83 = arith.mulf %81, %69 : vector<8x128xf32>
    %84 = arith.addf %83, %80 : vector<8x128xf32>
    %85 = math.tanh %84 : vector<8x128xf32>
    %86 = arith.mulf %82, %85 : vector<8x128xf32>
    %87 = vector.extract_strided_slice %36 {offsets = [16, 0], sizes = [8, 128], strides = [1, 1]} : vector<64x128xf32> to vector<8x128xf32>
    %88 = arith.truncf %86 : vector<8x128xf32> to vector<8x128xbf16>
    %cst_48 = arith.constant dense<0.000000e+00> : vector<8x128xf32>
    %89 = tpu.matmul %88, %38, %cst_48 {dimension_numbers = #tpu.dot_dimension_numbers<[1], [0], [0], [1], [0, 0, 1, 1], [], []>} : vector<8x128xbf16>, vector<128x128xbf16>, vector<8x128xf32> -> vector<8x128xf32>
    %90 = arith.addf %87, %89 : vector<8x128xf32>
    %91 = math.tanh %90 : vector<8x128xf32>
    %92 = arith.mulf %91, %49 : vector<8x128xf32>
    %93 = arith.addf %92, %52 : vector<8x128xf32>
    %c64_i32_49 = arith.constant 64 : i32
    %94 = tpu.dynamic_rotate %93 by %c64_i32_49 dim 1 : vector<8x128xf32>, i32 -> vector<8x128xf32>
    %95 = arith.mulf %93, %94 : vector<8x128xf32>
    %c96_i32_50 = arith.constant 96 : i32
    %96 = tpu.dynamic_rotate %93 by %c96_i32_50 dim 1 : vector<8x128xf32>, i32 -> vector<8x128xf32>
    %c32_i32_51 = arith.constant 32 : i32
    %97 = tpu.dynamic_rotate %93 by %c32_i32_51 dim 1 : vector<8x128xf32>, i32 -> vector<8x128xf32>
    %98 = arith.mulf %96, %84 : vector<8x128xf32>
    %99 = arith.addf %98, %95 : vector<8x128xf32>
    %100 = math.tanh %99 : vector<8x128xf32>
    %101 = arith.mulf %97, %100 : vector<8x128xf32>
    %102 = vector.extract_strided_slice %36 {offsets = [24, 0], sizes = [8, 128], strides = [1, 1]} : vector<64x128xf32> to vector<8x128xf32>
    %103 = arith.truncf %101 : vector<8x128xf32> to vector<8x128xbf16>
    %cst_52 = arith.constant dense<0.000000e+00> : vector<8x128xf32>
    %104 = tpu.matmul %103, %38, %cst_52 {dimension_numbers = #tpu.dot_dimension_numbers<[1], [0], [0], [1], [0, 0, 1, 1], [], []>} : vector<8x128xbf16>, vector<128x128xbf16>, vector<8x128xf32> -> vector<8x128xf32>
    %105 = arith.addf %102, %104 : vector<8x128xf32>
    %106 = math.tanh %105 : vector<8x128xf32>
    %107 = arith.mulf %106, %49 : vector<8x128xf32>
    %108 = arith.addf %107, %52 : vector<8x128xf32>
    %c64_i32_53 = arith.constant 64 : i32
    %109 = tpu.dynamic_rotate %108 by %c64_i32_53 dim 1 : vector<8x128xf32>, i32 -> vector<8x128xf32>
    %110 = arith.mulf %108, %109 : vector<8x128xf32>
    %c96_i32_54 = arith.constant 96 : i32
    %111 = tpu.dynamic_rotate %108 by %c96_i32_54 dim 1 : vector<8x128xf32>, i32 -> vector<8x128xf32>
    %c32_i32_55 = arith.constant 32 : i32
    %112 = tpu.dynamic_rotate %108 by %c32_i32_55 dim 1 : vector<8x128xf32>, i32 -> vector<8x128xf32>
    %113 = arith.mulf %111, %99 : vector<8x128xf32>
    %114 = arith.addf %113, %110 : vector<8x128xf32>
    %115 = math.tanh %114 : vector<8x128xf32>
    %116 = arith.mulf %112, %115 : vector<8x128xf32>
    %117 = vector.extract_strided_slice %36 {offsets = [32, 0], sizes = [8, 128], strides = [1, 1]} : vector<64x128xf32> to vector<8x128xf32>
    %118 = arith.truncf %116 : vector<8x128xf32> to vector<8x128xbf16>
    %cst_56 = arith.constant dense<0.000000e+00> : vector<8x128xf32>
    %119 = tpu.matmul %118, %38, %cst_56 {dimension_numbers = #tpu.dot_dimension_numbers<[1], [0], [0], [1], [0, 0, 1, 1], [], []>} : vector<8x128xbf16>, vector<128x128xbf16>, vector<8x128xf32> -> vector<8x128xf32>
    %120 = arith.addf %117, %119 : vector<8x128xf32>
    %121 = math.tanh %120 : vector<8x128xf32>
    %122 = arith.mulf %121, %49 : vector<8x128xf32>
    %123 = arith.addf %122, %52 : vector<8x128xf32>
    %c64_i32_57 = arith.constant 64 : i32
    %124 = tpu.dynamic_rotate %123 by %c64_i32_57 dim 1 : vector<8x128xf32>, i32 -> vector<8x128xf32>
    %125 = arith.mulf %123, %124 : vector<8x128xf32>
    %c96_i32_58 = arith.constant 96 : i32
    %126 = tpu.dynamic_rotate %123 by %c96_i32_58 dim 1 : vector<8x128xf32>, i32 -> vector<8x128xf32>
    %c32_i32_59 = arith.constant 32 : i32
    %127 = tpu.dynamic_rotate %123 by %c32_i32_59 dim 1 : vector<8x128xf32>, i32 -> vector<8x128xf32>
    %128 = arith.mulf %126, %114 : vector<8x128xf32>
    %129 = arith.addf %128, %125 : vector<8x128xf32>
    %130 = math.tanh %129 : vector<8x128xf32>
    %131 = arith.mulf %127, %130 : vector<8x128xf32>
    %132 = vector.extract_strided_slice %36 {offsets = [40, 0], sizes = [8, 128], strides = [1, 1]} : vector<64x128xf32> to vector<8x128xf32>
    %133 = arith.truncf %131 : vector<8x128xf32> to vector<8x128xbf16>
    %cst_60 = arith.constant dense<0.000000e+00> : vector<8x128xf32>
    %134 = tpu.matmul %133, %38, %cst_60 {dimension_numbers = #tpu.dot_dimension_numbers<[1], [0], [0], [1], [0, 0, 1, 1], [], []>} : vector<8x128xbf16>, vector<128x128xbf16>, vector<8x128xf32> -> vector<8x128xf32>
    %135 = arith.addf %132, %134 : vector<8x128xf32>
    %136 = math.tanh %135 : vector<8x128xf32>
    %137 = arith.mulf %136, %49 : vector<8x128xf32>
    %138 = arith.addf %137, %52 : vector<8x128xf32>
    %c64_i32_61 = arith.constant 64 : i32
    %139 = tpu.dynamic_rotate %138 by %c64_i32_61 dim 1 : vector<8x128xf32>, i32 -> vector<8x128xf32>
    %140 = arith.mulf %138, %139 : vector<8x128xf32>
    %c96_i32_62 = arith.constant 96 : i32
    %141 = tpu.dynamic_rotate %138 by %c96_i32_62 dim 1 : vector<8x128xf32>, i32 -> vector<8x128xf32>
    %c32_i32_63 = arith.constant 32 : i32
    %142 = tpu.dynamic_rotate %138 by %c32_i32_63 dim 1 : vector<8x128xf32>, i32 -> vector<8x128xf32>
    %143 = arith.mulf %141, %129 : vector<8x128xf32>
    %144 = arith.addf %143, %140 : vector<8x128xf32>
    %145 = math.tanh %144 : vector<8x128xf32>
    %146 = arith.mulf %142, %145 : vector<8x128xf32>
    %147 = vector.extract_strided_slice %36 {offsets = [48, 0], sizes = [8, 128], strides = [1, 1]} : vector<64x128xf32> to vector<8x128xf32>
    %148 = arith.truncf %146 : vector<8x128xf32> to vector<8x128xbf16>
    %cst_64 = arith.constant dense<0.000000e+00> : vector<8x128xf32>
    %149 = tpu.matmul %148, %38, %cst_64 {dimension_numbers = #tpu.dot_dimension_numbers<[1], [0], [0], [1], [0, 0, 1, 1], [], []>} : vector<8x128xbf16>, vector<128x128xbf16>, vector<8x128xf32> -> vector<8x128xf32>
    %150 = arith.addf %147, %149 : vector<8x128xf32>
    %151 = math.tanh %150 : vector<8x128xf32>
    %152 = arith.mulf %151, %49 : vector<8x128xf32>
    %153 = arith.addf %152, %52 : vector<8x128xf32>
    %c64_i32_65 = arith.constant 64 : i32
    %154 = tpu.dynamic_rotate %153 by %c64_i32_65 dim 1 : vector<8x128xf32>, i32 -> vector<8x128xf32>
    %155 = arith.mulf %153, %154 : vector<8x128xf32>
    %c96_i32_66 = arith.constant 96 : i32
    %156 = tpu.dynamic_rotate %153 by %c96_i32_66 dim 1 : vector<8x128xf32>, i32 -> vector<8x128xf32>
    %c32_i32_67 = arith.constant 32 : i32
    %157 = tpu.dynamic_rotate %153 by %c32_i32_67 dim 1 : vector<8x128xf32>, i32 -> vector<8x128xf32>
    %158 = arith.mulf %156, %144 : vector<8x128xf32>
    %159 = arith.addf %158, %155 : vector<8x128xf32>
    %160 = math.tanh %159 : vector<8x128xf32>
    %161 = arith.mulf %157, %160 : vector<8x128xf32>
    %162 = vector.extract_strided_slice %36 {offsets = [56, 0], sizes = [8, 128], strides = [1, 1]} : vector<64x128xf32> to vector<8x128xf32>
    %163 = arith.truncf %161 : vector<8x128xf32> to vector<8x128xbf16>
    %cst_68 = arith.constant dense<0.000000e+00> : vector<8x128xf32>
    %164 = tpu.matmul %163, %38, %cst_68 {dimension_numbers = #tpu.dot_dimension_numbers<[1], [0], [0], [1], [0, 0, 1, 1], [], []>} : vector<8x128xbf16>, vector<128x128xbf16>, vector<8x128xf32> -> vector<8x128xf32>
    %165 = arith.addf %162, %164 : vector<8x128xf32>
    %166 = math.tanh %165 : vector<8x128xf32>
    %167 = arith.mulf %166, %49 : vector<8x128xf32>
    %168 = arith.addf %167, %52 : vector<8x128xf32>
    %c64_i32_69 = arith.constant 64 : i32
    %169 = tpu.dynamic_rotate %168 by %c64_i32_69 dim 1 : vector<8x128xf32>, i32 -> vector<8x128xf32>
    %170 = arith.mulf %168, %169 : vector<8x128xf32>
    %c96_i32_70 = arith.constant 96 : i32
    %171 = tpu.dynamic_rotate %168 by %c96_i32_70 dim 1 : vector<8x128xf32>, i32 -> vector<8x128xf32>
    %c32_i32_71 = arith.constant 32 : i32
    %172 = tpu.dynamic_rotate %168 by %c32_i32_71 dim 1 : vector<8x128xf32>, i32 -> vector<8x128xf32>
    %173 = arith.mulf %171, %159 : vector<8x128xf32>
    %174 = arith.addf %173, %170 : vector<8x128xf32>
    %175 = math.tanh %174 : vector<8x128xf32>
    %176 = arith.mulf %172, %175 : vector<8x128xf32>
    %177 = arith.truncf %176 : vector<8x128xf32> to vector<8x128xbf16>
    %cst_72 = arith.constant dense<0.000000e+00> : vector<8x128xf32>
    %178 = tpu.matmul %177, %40, %cst_72 {dimension_numbers = #tpu.dot_dimension_numbers<[1], [0], [0], [1], [0, 0, 1, 1], [], []>} : vector<8x128xbf16>, vector<128x128xbf16>, vector<8x128xf32> -> vector<8x128xf32>
    %179 = vector.broadcast %4 : vector<1x128xf32> to vector<8x128xf32>
    %180 = arith.addf %178, %179 : vector<8x128xf32>
    %181 = vector.extract_strided_slice %180 {offsets = [0, 0], sizes = [2, 8], strides = [1, 1]} : vector<8x128xf32> to vector<2x8xf32>
    %182 = vector.extract_strided_slice %180 {offsets = [0, 8], sizes = [2, 1], strides = [1, 1]} : vector<8x128xf32> to vector<2x1xf32>
    %cst_73 = arith.constant dense<0.000000e+00> : vector<2xf32>
    %183 = vector.multi_reduction <add>, %181, %cst_73 [1] : vector<2x8xf32> to vector<2xf32>
    %184 = vector.shape_cast %183 : vector<2xf32> to vector<2x1xf32>
    %cst_74 = arith.constant 8.000000e+00 : f32
    %185 = vector.broadcast %cst_74 : f32 to vector<2x1xf32>
    %186 = arith.divf %184, %185 : vector<2x1xf32>
    %187 = vector.broadcast %186 : vector<2x1xf32> to vector<2x8xf32>
    %188 = arith.subf %181, %187 : vector<2x8xf32>
    %189 = vector.broadcast %182 : vector<2x1xf32> to vector<2x8xf32>
    %190 = arith.addf %189, %188 : vector<2x8xf32>
    %c0_75 = arith.constant 0 : index
    %c0_76 = arith.constant 0 : index
    %191 = vector.load %arg10[%c0_75, %c0_76] : memref<2x8xf32, #tpu.memory_space<vmem>>, vector<2x8xf32>
    tpu.vector_store %arg10[%c0_75, %c0_76], %190 {strides = array<i32>} : memref<2x8xf32, #tpu.memory_space<vmem>>, vector<2x8xf32>,
    %192 = vector.extract_strided_slice %176 {offsets = [0, 0], sizes = [2, 32], strides = [1, 1]} : vector<8x128xf32> to vector<2x32xf32>
    %c0_77 = arith.constant 0 : index
    %c0_78 = arith.constant 0 : index
    %193 = vector.load %arg11[%c0_77, %c0_78] : memref<2x32xf32, #tpu.memory_space<vmem>>, vector<2x32xf32>
    tpu.vector_store %arg11[%c0_77, %c0_78], %192 {strides = array<i32>} : memref<2x32xf32, #tpu.memory_space<vmem>>, vector<2x32xf32>,
    %194 = vector.extract_strided_slice %174 {offsets = [0, 0], sizes = [2, 32], strides = [1, 1]} : vector<8x128xf32> to vector<2x32xf32>
    %c0_79 = arith.constant 0 : index
    %c0_80 = arith.constant 0 : index
    %195 = vector.load %arg12[%c0_79, %c0_80] : memref<2x32xf32, #tpu.memory_space<vmem>>, vector<2x32xf32>
    tpu.vector_store %arg12[%c0_79, %c0_80], %194 {strides = array<i32>} : memref<2x32xf32, #tpu.memory_space<vmem>>, vector<2x32xf32>,
    return
  }
}

</mosaic_0001>

<llo_original>
// kernel: q_net_forward.2
$region0: #{q_net_forward.2}
  #allocation0 [shape = 'u32[]', space=smem, size = 0x4, offset = 0x4, fixed_abs, tag = 'smem constant byte address 0x4 - core index']
  #allocation1 [shape = 'u32[144,128]{1,0:T(1,128)}', space=vmem, size = 0x12000, scoped, tag = 'internal scratch']
  #allocation2 [shape = 'u32[2048]{0}', space=vmem, size = 0x2000, scoped, tag = 'scoped memory for q_net_forward.2']
  #allocation3 [shape = 'u32[2048]{0}', space=vmem, size = 0x2000, scoped, tag = 'scoped memory for q_net_forward.2']
  #allocation4 [shape = 'u32[2048]{0}', space=vmem, size = 0x2000, scoped, tag = 'scoped memory for q_net_forward.2']
  #allocation5 [shape = 'u32[2048]{0}', space=vmem, size = 0x2000, scoped, tag = 'scoped memory for q_net_forward.2']
  #allocation6 [shape = 'u32[2048]{0}', space=vmem, size = 0x2000, scoped, tag = 'scoped memory for q_net_forward.2']
  #allocation7 [shape = 'u32[2048]{0}', space=vmem, size = 0x2000, scoped, tag = 'scoped memory for q_net_forward.2']
  #allocation8 [shape = 'u32[2048]{0}', space=vmem, size = 0x2000, scoped, tag = 'scoped memory for q_net_forward.2']
  #allocation9 [shape = 'u32[2048]{0}', space=vmem, size = 0x2000, scoped, tag = 'scoped memory for q_net_forward.2']
  #allocation10 [shape = 'u32[2048]{0}', space=vmem, size = 0x2000, scoped, tag = 'scoped memory for q_net_forward.2']
  #allocation11 [shape = 'u32[2048]{0}', space=vmem, size = 0x2000, scoped, tag = 'scoped memory for q_net_forward.2']
  #allocation12 [shape = 'u32[2048]{0}', space=vmem, size = 0x2000, scoped, tag = 'scoped memory for q_net_forward.2']
  #allocation13 [shape = 'u32[2048]{0}', space=vmem, size = 0x2000, scoped, tag = 'scoped memory for q_net_forward.2']
  #allocation14 [shape = 'u32[2048]{0}', space=vmem, size = 0x2000, scoped, tag = 'scoped memory for q_net_forward.2']
  #allocation15 [shape = 'u32[2048]{0}', space=vmem, size = 0x2000, scoped, tag = 'scoped memory for q_net_forward.2']
  #allocation16 [shape = 'u32[2048]{0}', space=vmem, size = 0x2000, scoped, tag = 'scoped memory for q_net_forward.2']
  #allocation17 [shape = 'u32[2048]{0}', space=vmem, size = 0x2000, scoped, tag = 'scoped memory for q_net_forward.2']
  #allocation18 [shape = 'u32[2048]{0}', space=vmem, size = 0x2000, scoped, tag = 'scoped memory for q_net_forward.2']
  #allocation19 [shape = 'u32[2048]{0}', space=vmem, size = 0x2000, scoped, tag = 'scoped memory for q_net_forward.2']
  #allocation20 [shape = 'u32[2048]{0}', space=vmem, size = 0x2000, scoped, tag = 'scoped memory for q_net_forward.2']
  #allocation21 [shape = 'u32[2048]{0}', space=vmem, size = 0x2000, scoped, tag = 'scoped memory for q_net_forward.2']
  %s0 = inlined_call_operand.vmem [shape: bf16[64,128], index: 0, kind: input, shape index: {}]
  %s1 = inlined_call_operand.hbm [shape: bf16[64,128], index: 1, kind: input, shape index: {}]
  %s2 = inlined_call_operand.vmem [shape: bf16[128,256], index: 2, kind: input, shape index: {}]
  %s3 = inlined_call_operand.hbm [shape: bf16[256,512], index: 3, kind: input, shape index: {}]
  %s4 = inlined_call_operand.hbm [shape: bf16[512,128], index: 4, kind: input, shape index: {}]
  %s5 = inlined_call_operand.hbm [shape: bf16[2,128,128], index: 5, kind: input, shape index: {}]
  %s6 = inlined_call_operand.vmem [shape: f32[1,1152], index: 6, kind: input, shape index: {}]
  %s7 = inlined_call_operand.vmem [shape: f32[8,2,51], index: 7, kind: input, shape index: {}]
  %s8 = inlined_call_operand.<no memory space> [shape: f32[], index: 8, kind: input, shape index: {}]
  %s9 = inlined_call_operand.vmem [shape: f32[8,2,49], index: 9, kind: input, shape index: {}]
  %s10 = inlined_call_operand.vmem [shape: f32[1,8,128], index: 10, kind: input, shape index: {}]
  %s11 = inlined_call_operand.<no memory space> [shape: f32[], index: 11, kind: input, shape index: {}]
  %s12 = inlined_call_operand.vmem [shape: f32[1,8,128], index: 12, kind: input, shape index: {}]
  %s13 = inlined_call_operand.hbm [shape: f32[2,8], index: 13, kind: output, shape index: {0}]
  %s14 = inlined_call_operand.hbm [shape: f32[2,32], index: 14, kind: output, shape index: {1}]
  %s15 = inlined_call_operand.hbm [shape: f32[2,32], index: 15, kind: output, shape index: {2}]
  %16 = xla_tuple %s13, %s14, %s15
  %s17 = sld [smem:[#allocation0]]
  $region86: #{q_net_forward.2} parent=0
    _
  %s19 = ssub.s32 1, %s17
  %s20 = scalar_select 0, %s19, %s17
  %v21 = vstv %s8
  %v22 = vstv %s8
  %v23 = vstv %s11
  %v24 = vstv %s11
  $region1: #{q_net_forward.2} parent=0
    #allocation22 [shape = 'u8[16384]{0}', space=vmem, size = 0x4000, scoped, tag = 'input window, operand 3, single buffered']
    #allocation23 [shape = 's32[1]{0}', space=sflag, size = 0x4, scoped, tag = 'scoped memory for q_net_forward.2']
    #allocation24 [shape = 's32[1]{0}', space=sflag, size = 0x4, scoped, tag = 'scoped memory for q_net_forward.2']
    #allocation25 [shape = 'u8[262144]{0}', space=vmem, size = 0x40000, scoped, tag = 'input window, operand 5, single buffered']
    #allocation26 [shape = 's32[1]{0}', space=sflag, size = 0x4, scoped, tag = 'scoped memory for q_net_forward.2']
    #allocation27 [shape = 'u8[131072]{0}', space=vmem, size = 0x20000, scoped, tag = 'input window, operand 6, single buffered']
    #allocation28 [shape = 'u8[65536]{0}', space=vmem, size = 0x10000, scoped, tag = 'input window, operand 7, single buffered']
    #allocation29 [shape = 's32[1]{0}', space=sflag, size = 0x4, scoped, tag = 'scoped memory for q_net_forward.2']
    #allocation30 [shape = 'u8[1024]{0}', space=vmem, size = 0x400, scoped, tag = 'output window, operand 0, single buffered']
    #allocation31 [shape = 'u8[1024]{0}', space=vmem, size = 0x400, scoped, tag = 'output window, operand 1, single buffered']
    #allocation32 [shape = 's32[1]{0}', space=sflag, size = 0x4, scoped, tag = 'scoped memory for q_net_forward.2']
    #allocation33 [shape = 'u8[1024]{0}', space=vmem, size = 0x400, scoped, tag = 'output window, operand 2, single buffered']
    #allocation34 [shape = 'u8[32768]{0}', space=vmem, size = 0x8000, dematerialized = true, scoped, tag = 'FusionAdapter Buffer %pad_bitcast_fusion.1 = f32[64,64]{1,0:T(8,128)} fusion(%param_7.3, %param_8.3), kind=kLoop, calls=%fused_computation.clone.clone, metadata={op_name="jit(q_net_forward)/reshape" stack_frame_id=12}']
    #allocation35 [shape = 'u8[32768]{0}', space=vmem, size = 0x8000, dematerialized = true, scoped, tag = 'FusionAdapter Buffer %fusion.1 = f32[64,64]{1,0:T(8,128)} fusion(%param_9.3, %param_8.3), kind=kLoop, calls=%fused_computation.2.clone, metadata={op_name="jit(q_net_forward)/reshape" stack_frame_id=17}']
    #allocation36 [shape = 'u8[8192]{0}', space=vmem, size = 0x2000, dematerialized = true, scoped, tag = 'FusionAdapter Buffer %fusion.3 = f32[2,8,128]{2,1,0:T(8,128)} fusion(%param_10.4, %param_11.2, %param_12.1), kind=kLoop, calls=%fused_computation.4.clone, metadata={op_name="jit(q_net_forward)/concatenate" stack_frame_id=22}']
    %25 = vsyncpa [#allocation23], 0
    %26 = vsyncpa [#allocation26], 0
    %27 = vsyncpa [#allocation29], 0
    %28 = vsyncpa [#allocation24], 0
    %29 = vsyncpa [#allocation32], 0
    // Predicated region
    $region2: #{q_net_forward.2} parent=1 // pred_check
      _
    $region3: #{q_net_forward.2} parent=1 // pred_check_branch
      %31 = sbr.rel (0) target = $region5
    $region4: #{q_net_forward.2} parent=1 // pred_region
      _
    $region5: #{q_net_forward.2} parent=1 // pred_fallthru
      _
    // Predicated region
    $region6: #{q_net_forward.2} parent=1 // pred_check
      _
    $region7: #{q_net_forward.2} parent=1 // pred_check_branch
      %33 = sbr.rel (0) target = $region9
    $region8: #{q_net_forward.2} parent=1 // pred_region
      _
    $region9: #{q_net_forward.2} parent=1 // pred_fallthru
      _
    // Predicated region
    $region10: #{q_net_forward.2} parent=1 // pred_check
      _
    $region11: #{q_net_forward.2} parent=1 // pred_check_branch
      %35 = sbr.rel (0) target = $region13
    $region12: #{q_net_forward.2} parent=1 // pred_region
      _
    $region13: #{q_net_forward.2} parent=1 // pred_fallthru
      _
    // Predicated region
    $region14: #{q_net_forward.2} parent=1 // pred_check
      _
    $region15: #{q_net_forward.2} parent=1 // pred_check_branch
      %37 = sbr.rel (0) target = $region17
    $region16: #{q_net_forward.2} parent=1 // pred_region
      %s39 = ssub.s32 512, 512
      %40 = vsyncadd [#allocation23], %s39
      %s41 = sshll.u32 [#allocation22], 4
      %s42 = int_to_ptr.vmem [resolvable:$true] %s41
      %47 = dma.hbm_to_vmem [thread:$0]  %s1, 512, %s42, [#allocation23], 64, 64, 4
    $region17: #{q_net_forward.2} parent=1 // pred_fallthru
      _
    // Predicated region
    $region18: #{q_net_forward.2} parent=1 // pred_check
      _
    $region19: #{q_net_forward.2} parent=1 // pred_check_branch
      %49 = sbr.rel (0) target = $region21
    $region20: #{q_net_forward.2} parent=1 // pred_region
      _
    $region21: #{q_net_forward.2} parent=1 // pred_fallthru
      _
    // Predicated region
    $region22: #{q_net_forward.2} parent=1 // pred_check
      _
    $region23: #{q_net_forward.2} parent=1 // pred_check_branch
      %51 = sbr.rel (0) target = $region25
    $region24: #{q_net_forward.2} parent=1 // pred_region
      %s53 = ssub.s32 8192, 8192
      %54 = vsyncadd [#allocation26], %s53
      %s55 = sshll.u32 [#allocation25], 4
      %s56 = int_to_ptr.vmem [resolvable:$true] %s55
      %61 = dma.hbm_to_vmem [thread:$0]  %s3, 8192, %s56, [#allocation26], 256, 256, 16
    $region25: #{q_net_forward.2} parent=1 // pred_fallthru
      _
    // Predicated region
    $region26: #{q_net_forward.2} parent=1 // pred_check
      _
    $region27: #{q_net_forward.2} parent=1 // pred_check_branch
      %63 = sbr.rel (0) target = $region29
    $region28: #{q_net_forward.2} parent=1 // pred_region
      %s65 = ssub.s32 4096, 4096
      %66 = vsyncadd [#allocation26], %s65
      %s67 = sshll.u32 [#allocation27], 4
      %s68 = int_to_ptr.vmem [resolvable:$true] %s67
      %73 = dma.hbm_to_vmem [thread:$0]  %s4, 4096, %s68, [#allocation26], 64, 64, 4
    $region29: #{q_net_forward.2} parent=1 // pred_fallthru
      _
    // Predicated region
    $region30: #{q_net_forward.2} parent=1 // pred_check
      _
    $region31: #{q_net_forward.2} parent=1 // pred_check_branch
      %75 = sbr.rel (0) target = $region33
    $region32: #{q_net_forward.2} parent=1 // pred_region
      %s77 = ssub.s32 2048, 2048
      %78 = vsyncadd [#allocation29], %s77
      %s79 = sshll.u32 [#allocation28], 4
      %s80 = int_to_ptr.vmem [resolvable:$true] %s79
      %85 = dma.hbm_to_vmem [thread:$0]  %s5, 2048, %s80, [#allocation29], 64, 64, 4
    $region33: #{q_net_forward.2} parent=1 // pred_fallthru
      _
    // Predicated region
    $region34: #{q_net_forward.2} parent=1 // pred_check
      _
    $region35: #{q_net_forward.2} parent=1 // pred_check_branch
      %87 = sbr.rel (0) target = $region37
    $region36: #{q_net_forward.2} parent=1 // pred_region
      _
    $region37: #{q_net_forward.2} parent=1 // pred_fallthru
      _
    // Predicated region
    $region38: #{q_net_forward.2} parent=1 // pred_check
      _
    $region39: #{q_net_forward.2} parent=1 // pred_check_branch
      %89 = sbr.rel (0) target = $region41
    $region40: #{q_net_forward.2} parent=1 // pred_region
      %s91 = ssub.s32 1, 0
      %s92 = smul.u32 128, %s91
      %p93 = scmp.lt.s32.totalorder 0, 0
      %s94 = scalar_select %p93, 0, 0
      %s95 = smul.addr %s94, 8
      %s96 = scalar_lea.vmem %s10, %s95
      %s98 = ssub.s32 1, 0
      %s99 = smul.u32 128, %s98
    $region41: #{q_net_forward.2} parent=1 // pred_fallthru
      _
    // Predicated region
    $region42: #{q_net_forward.2} parent=1 // pred_check
      _
    $region43: #{q_net_forward.2} parent=1 // pred_check_branch
      %101 = sbr.rel (0) target = $region45
    $region44: #{q_net_forward.2} parent=1 // pred_region
      _
    $region45: #{q_net_forward.2} parent=1 // pred_fallthru
      _
    // Predicated region
    $region46: #{q_net_forward.2} parent=1 // pred_check
      _
    $region47: #{q_net_forward.2} parent=1 // pred_check_branch
      %103 = sbr.rel (0) target = $region49
    $region48: #{q_net_forward.2} parent=1 // pred_region
      %104 = dma.done [#allocation23], 512
    $region49: #{q_net_forward.2} parent=1 // pred_fallthru
      _
    // Predicated region
    $region50: #{q_net_forward.2} parent=1 // pred_check
      _
    $region51: #{q_net_forward.2} parent=1 // pred_check_branch
      %106 = sbr.rel (0) target = $region53
    $region52: #{q_net_forward.2} parent=1 // pred_region
      %107 = dma.done [#allocation26], 8192
    $region53: #{q_net_forward.2} parent=1 // pred_fallthru
      _
    // Predicated region
    $region54: #{q_net_forward.2} parent=1 // pred_check
      _
    $region55: #{q_net_forward.2} parent=1 // pred_check_branch
      %109 = sbr.rel (0) target = $region57
    $region56: #{q_net_forward.2} parent=1 // pred_region
      %110 = dma.done [#allocation26], 4096
    $region57: #{q_net_forward.2} parent=1 // pred_fallthru
      _
    // Predicated region
    $region58: #{q_net_forward.2} parent=1 // pred_check
      _
    $region59: #{q_net_forward.2} parent=1 // pred_check_branch
      %112 = sbr.rel (0) target = $region61
    $region60: #{q_net_forward.2} parent=1 // pred_region
      %113 = dma.done [#allocation29], 2048
    $region61: #{q_net_forward.2} parent=1 // pred_fallthru
      _
    %s115 = ssub.s32 1, 0
    %s116 = smul.u32 128, %s115
    %p117 = scmp.lt.s32.totalorder 0, 0
    %s118 = scalar_select %p117, 0, 0
    %s119 = smul.addr %s118, 8
    %s120 = scalar_lea.vmem %s10, %s119
    %s122 = ssub.s32 1, 0
    %s123 = smul.u32 128, %s122
    %p124 = scmp.lt.s32.totalorder 0, 0
    %s125 = scalar_select %p124, 0, 0
    %s126 = smul.addr %s125, 8
    %s127 = scalar_lea.vmem %s10, %s126
    %s129 = ssub.s32 1, 0
    %s130 = smul.u32 128, %s129
    %v131 = vld [vmem:[%s7] sm:$0x3]
    %v132 = vlaneseq
    %v133 = vshrl.u32 %v132, 7
    %vm135 = vcmp.lt.s32.totalorder %v133, 2
    %v136 = vsel %vm135, %v131, %v21
    %v137 = vlaneseq
    %v138 = vand.u32 %v137, 127
    %vm140 = vcmp.lt.s32.totalorder %v138, 51
    %v141 = vsel %vm140, %v136, %v21
    %s143 = ssub.s32 256, 1
    %144 = vst [vmem:[#allocation34] sm:%s143] %v141
    %s145 = scalar_lea.vmem %s7, 2
    %v146 = vld [vmem:[%s145] sm:$0x3]
    %v147 = vlaneseq
    %v148 = vshrl.u32 %v147, 7
    %vm150 = vcmp.lt.s32.totalorder %v148, 2
    %v151 = vsel %vm150, %v146, %v21
    %v152 = vlaneseq
    %v153 = vand.u32 %v152, 127
    %vm155 = vcmp.lt.s32.totalorder %v153, 51
    %v156 = vsel %vm155, %v151, %v21
    %s157 = scalar_lea.vmem [#allocation34], 8
    %s159 = ssub.s32 256, 1
    %160 = vst [vmem:[%s157] sm:%s159] %v156
    %s161 = scalar_lea.vmem %s7, 4
    %v162 = vld [vmem:[%s161] sm:$0x3]
    %v163 = vlaneseq
    %v164 = vshrl.u32 %v163, 7
    %vm166 = vcmp.lt.s32.totalorder %v164, 2
    %v167 = vsel %vm166, %v162, %v21
    %v168 = vlaneseq
    %v169 = vand.u32 %v168, 127
    %vm171 = vcmp.lt.s32.totalorder %v169, 51
    %v172 = vsel %vm171, %v167, %v21
    %s173 = scalar_lea.vmem [#allocation34], 16
    %s175 = ssub.s32 256, 1
    %176 = vst [vmem:[%s173] sm:%s175] %v172
    %s177 = scalar_lea.vmem %s7, 6
    %v178 = vld [vmem:[%s177] sm:$0x3]
    %v179 = vlaneseq
    %v180 = vshrl.u32 %v179, 7
    %vm182 = vcmp.lt.s32.totalorder %v180, 2
    %v183 = vsel %vm182, %v178, %v21
    %v184 = vlaneseq
    %v185 = vand.u32 %v184, 127
    %vm187 = vcmp.lt.s32.totalorder %v185, 51
    %v188 = vsel %vm187, %v183, %v21
    %s189 = scalar_lea.vmem [#allocation34], 24
    %s191 = ssub.s32 256, 1
    %192 = vst [vmem:[%s189] sm:%s191] %v188
    %s193 = scalar_lea.vmem %s7, 8
    %v194 = vld [vmem:[%s193] sm:$0x3]
    %v195 = vlaneseq
    %v196 = vshrl.u32 %v195, 7
    %vm198 = vcmp.lt.s32.totalorder %v196, 2
    %v199 = vsel %vm198, %v194, %v21
    %v200 = vlaneseq
    %v201 = vand.u32 %v200, 127
    %vm203 = vcmp.lt.s32.totalorder %v201, 51
    %v204 = vsel %vm203, %v199, %v21
    %s205 = scalar_lea.vmem [#allocation34], 32
    %s207 = ssub.s32 256, 1
    %208 = vst [vmem:[%s205] sm:%s207] %v204
    %s209 = scalar_lea.vmem %s7, 10
    %v210 = vld [vmem:[%s209] sm:$0x3]
    %v211 = vlaneseq
    %v212 = vshrl.u32 %v211, 7
    %vm214 = vcmp.lt.s32.totalorder %v212, 2
    %v215 = vsel %vm214, %v210, %v21
    %v216 = vlaneseq
    %v217 = vand.u32 %v216, 127
    %vm219 = vcmp.lt.s32.totalorder %v217, 51
    %v220 = vsel %vm219, %v215, %v21
    %s221 = scalar_lea.vmem [#allocation34], 40
    %s223 = ssub.s32 256, 1
    %224 = vst [vmem:[%s221] sm:%s223] %v220
    %s225 = scalar_lea.vmem %s7, 12
    %v226 = vld [vmem:[%s225] sm:$0x3]
    %v227 = vlaneseq
    %v228 = vshrl.u32 %v227, 7
    %vm230 = vcmp.lt.s32.totalorder %v228, 2
    %v231 = vsel %vm230, %v226, %v21
    %v232 = vlaneseq
    %v233 = vand.u32 %v232, 127
    %vm235 = vcmp.lt.s32.totalorder %v233, 51
    %v236 = vsel %vm235, %v231, %v21
    %s237 = scalar_lea.vmem [#allocation34], 48
    %s239 = ssub.s32 256, 1
    %240 = vst [vmem:[%s237] sm:%s239] %v236
    %s241 = scalar_lea.vmem %s7, 14
    %v242 = vld [vmem:[%s241] sm:$0x3]
    %v243 = vlaneseq
    %v244 = vshrl.u32 %v243, 7
    %vm246 = vcmp.lt.s32.totalorder %v244, 2
    %v247 = vsel %vm246, %v242, %v21
    %v248 = vlaneseq
    %v249 = vand.u32 %v248, 127
    %vm251 = vcmp.lt.s32.totalorder %v249, 51
    %v252 = vsel %vm251, %v247, %v21
    %s253 = scalar_lea.vmem [#allocation34], 56
    %s255 = ssub.s32 256, 1
    %256 = vst [vmem:[%s253] sm:%s255] %v252
    %v257 = vld [vmem:[%s9] sm:$0x3]
    %v258 = vlaneseq
    %v259 = vshrl.u32 %v258, 7
    %vm261 = vcmp.lt.s32.totalorder %v259, 2
    %v262 = vsel %vm261, %v257, %v22
    %v263 = vlaneseq
    %v264 = vand.u32 %v263, 127
    %vm266 = vcmp.lt.s32.totalorder %v264, 49
    %v267 = vsel %vm266, %v262, %v22
    %s269 = ssub.s32 256, 1
    %270 = vst [vmem:[#allocation35] sm:%s269] %v267
    %s271 = scalar_lea.vmem %s9, 2
    %v272 = vld [vmem:[%s271] sm:$0x3]
    %v273 = vlaneseq
    %v274 = vshrl.u32 %v273, 7
    %vm276 = vcmp.lt.s32.totalorder %v274, 2
    %v277 = vsel %vm276, %v272, %v22
    %v278 = vlaneseq
    %v279 = vand.u32 %v278, 127
    %vm281 = vcmp.lt.s32.totalorder %v279, 49
    %v282 = vsel %vm281, %v277, %v22
    %s283 = scalar_lea.vmem [#allocation35], 8
    %s285 = ssub.s32 256, 1
    %286 = vst [vmem:[%s283] sm:%s285] %v282
    %s287 = scalar_lea.vmem %s9, 4
    %v288 = vld [vmem:[%s287] sm:$0x3]
    %v289 = vlaneseq
    %v290 = vshrl.u32 %v289, 7
    %vm292 = vcmp.lt.s32.totalorder %v290, 2
    %v293 = vsel %vm292, %v288, %v22
    %v294 = vlaneseq
    %v295 = vand.u32 %v294, 127
    %vm297 = vcmp.lt.s32.totalorder %v295, 49
    %v298 = vsel %vm297, %v293, %v22
    %s299 = scalar_lea.vmem [#allocation35], 16
    %s301 = ssub.s32 256, 1
    %302 = vst [vmem:[%s299] sm:%s301] %v298
    %s303 = scalar_lea.vmem %s9, 6
    %v304 = vld [vmem:[%s303] sm:$0x3]
    %v305 = vlaneseq
    %v306 = vshrl.u32 %v305, 7
    %vm308 = vcmp.lt.s32.totalorder %v306, 2
    %v309 = vsel %vm308, %v304, %v22
    %v310 = vlaneseq
    %v311 = vand.u32 %v310, 127
    %vm313 = vcmp.lt.s32.totalorder %v311, 49
    %v314 = vsel %vm313, %v309, %v22
    %s315 = scalar_lea.vmem [#allocation35], 24
    %s317 = ssub.s32 256, 1
    %318 = vst [vmem:[%s315] sm:%s317] %v314
    %s319 = scalar_lea.vmem %s9, 8
    %v320 = vld [vmem:[%s319] sm:$0x3]
    %v321 = vlaneseq
    %v322 = vshrl.u32 %v321, 7
    %vm324 = vcmp.lt.s32.totalorder %v322, 2
    %v325 = vsel %vm324, %v320, %v22
    %v326 = vlaneseq
    %v327 = vand.u32 %v326, 127
    %vm329 = vcmp.lt.s32.totalorder %v327, 49
    %v330 = vsel %vm329, %v325, %v22
    %s331 = scalar_lea.vmem [#allocation35], 32
    %s333 = ssub.s32 256, 1
    %334 = vst [vmem:[%s331] sm:%s333] %v330
    %s335 = scalar_lea.vmem %s9, 10
    %v336 = vld [vmem:[%s335] sm:$0x3]
    %v337 = vlaneseq
    %v338 = vshrl.u32 %v337, 7
    %vm340 = vcmp.lt.s32.totalorder %v338, 2
    %v341 = vsel %vm340, %v336, %v22
    %v342 = vlaneseq
    %v343 = vand.u32 %v342, 127
    %vm345 = vcmp.lt.s32.totalorder %v343, 49
    %v346 = vsel %vm345, %v341, %v22
    %s347 = scalar_lea.vmem [#allocation35], 40
    %s349 = ssub.s32 256, 1
    %350 = vst [vmem:[%s347] sm:%s349] %v346
    %s351 = scalar_lea.vmem %s9, 12
    %v352 = vld [vmem:[%s351] sm:$0x3]
    %v353 = vlaneseq
    %v354 = vshrl.u32 %v353, 7
    %vm356 = vcmp.lt.s32.totalorder %v354, 2
    %v357 = vsel %vm356, %v352, %v22
    %v358 = vlaneseq
    %v359 = vand.u32 %v358, 127
    %vm361 = vcmp.lt.s32.totalorder %v359, 49
    %v362 = vsel %vm361, %v357, %v22
    %s363 = scalar_lea.vmem [#allocation35], 48
    %s365 = ssub.s32 256, 1
    %366 = vst [vmem:[%s363] sm:%s365] %v362
    %s367 = scalar_lea.vmem %s9, 14
    %v368 = vld [vmem:[%s367] sm:$0x3]
    %v369 = vlaneseq
    %v370 = vshrl.u32 %v369, 7
    %vm372 = vcmp.lt.s32.totalorder %v370, 2
    %v373 = vsel %vm372, %v368, %v22
    %v374 = vlaneseq
    %v375 = vand.u32 %v374, 127
    %vm377 = vcmp.lt.s32.totalorder %v375, 49
    %v378 = vsel %vm377, %v373, %v22
    %s379 = scalar_lea.vmem [#allocation35], 56
    %s381 = ssub.s32 256, 1
    %382 = vst [vmem:[%s379] sm:%s381] %v378
    %s383 = ssub.s32 0, 0
    %p384 = scmp.lt.s32.totalorder %s383, 0
    %s385 = scalar_select %p384, 0, 255
    %v386 = vld [vmem:[%s127] sm:%s385]
    %v387 = vld [vmem:[%s12] sm:$0xff]
    %388 = xla_tuple %v387, %v23
    %389 = xla_tuple %388
    %v390 = vmax.f32 %v387, %v23
    %391 = xla_tuple %v390
    %s393 = ssub.s32 256, 1
    %394 = vst [vmem:[#allocation36] sm:%s393] %v390
    %395 = xla_tuple %v24, %v386
    %396 = xla_tuple %395
    %v397 = vmax.f32 %v24, %v386
    %398 = xla_tuple %v397
    %s399 = scalar_lea.vmem [#allocation36], 8
    %s401 = ssub.s32 256, 1
    %402 = vst [vmem:[%s399] sm:%s401] %v397
    %v404 = vld [vmem:[%s6] sm:$0x1]
    %v405 = vld [vmem:[%s6 + $0x1] sm:$0x3]
    %v406 = vld [vmem:[%s6 + $0x3] sm:$0xf]
    %v407 = vld [vmem:[%s6 + $0x7] sm:$0x1]
    %v408 = vld [vmem:[%s6 + $0x8] sm:$0x1]
    %v409 = vld [vmem:[#allocation34] sm:$0xff]
    %v410 = vld [vmem:[#allocation34 + $0x8] sm:$0xff]
    %v411 = vld [vmem:[#allocation34 + $0x10] sm:$0xff]
    %v412 = vld [vmem:[#allocation34 + $0x18] sm:$0xff]
    %v413 = vld [vmem:[#allocation34 + $0x20] sm:$0xff]
    %v414 = vld [vmem:[#allocation34 + $0x28] sm:$0xff]
    %v415 = vld [vmem:[#allocation34 + $0x30] sm:$0xff]
    %v416 = vld [vmem:[#allocation34 + $0x38] sm:$0xff]
    %v417 = vpack.c.bf16 %v410, %v409
    %v418 = vpack.c.bf16 %v412, %v411
    %v419 = vpack.c.bf16 %v414, %v413
    %v420 = vpack.c.bf16 %v416, %v415
    %v421 = vld [vmem:[#allocation35] sm:$0xff]
    %v422 = vld [vmem:[#allocation35 + $0x8] sm:$0xff]
    %v423 = vld [vmem:[#allocation35 + $0x10] sm:$0xff]
    %v424 = vld [vmem:[#allocation35 + $0x18] sm:$0xff]
    %v425 = vld [vmem:[#allocation35 + $0x20] sm:$0xff]
    %v426 = vld [vmem:[#allocation35 + $0x28] sm:$0xff]
    %v427 = vld [vmem:[#allocation35 + $0x30] sm:$0xff]
    %v428 = vld [vmem:[#allocation35 + $0x38] sm:$0xff]
    %v429 = vpack.c.bf16 %v422, %v421
    %v430 = vpack.c.bf16 %v424, %v423
    %v431 = vpack.c.bf16 %v426, %v425
    %v432 = vpack.c.bf16 %v428, %v427
    %v433 = vld [vmem:[%s0] sm:$0xf]
    %v434 = vld [vmem:[%s0 + $0x4] sm:$0xf]
    %v435 = vld [vmem:[%s0 + $0x8] sm:$0xf]
    %v436 = vld [vmem:[%s0 + $0xc] sm:$0xf]
    %v437 = vld [vmem:[%s0 + $0x10] sm:$0xf]
    %v438 = vld [vmem:[%s0 + $0x14] sm:$0xf]
    %v439 = vld [vmem:[%s0 + $0x18] sm:$0xf]
    %v440 = vld [vmem:[%s0 + $0x1c] sm:$0xf]
    %v441 = vld [vmem:[#allocation22] sm:$0xf]
    %v442 = vld [vmem:[#allocation22 + $0x4] sm:$0xf]
    %v443 = vld [vmem:[#allocation22 + $0x8] sm:$0xf]
    %v444 = vld [vmem:[#allocation22 + $0xc] sm:$0xf]
    %v445 = vld [vmem:[#allocation22 + $0x10] sm:$0xf]
    %v446 = vld [vmem:[#allocation22 + $0x14] sm:$0xf]
    %v447 = vld [vmem:[#allocation22 + $0x18] sm:$0xf]
    %v448 = vld [vmem:[#allocation22 + $0x1c] sm:$0xf]
    %v457 = vunpack.c.l.b16 %v441
    %v458 = vunpack.c.l.b16 %v442
    %v459 = vunpack.c.l.b16 %v443
    %v460 = vunpack.c.l.b16 %v444
    %v461 = vunpack.c.l.b16 %v445
    %v462 = vunpack.c.l.b16 %v446
    %v463 = vunpack.c.l.b16 %v447
    %v464 = vunpack.c.l.b16 %v448
    %v465 = vpack.c.b16 %v458, %v457
    %v466 = vpack.c.b16 %v460, %v459
    %v467 = vpack.c.b16 %v462, %v461
    %v468 = vpack.c.b16 %v464, %v463
    %vm473 = vcmask 523264
    %v475 = vsel %vm473, %v429, 0
    %v478 = vsel %vm473, %v430, 0
    %v481 = vsel %vm473, %v431, 0
    %v484 = vsel %vm473, %v432, 0
    %486 = vmatprep.subr.bf16.mxu0 0
    %487 = vmatpush1.bf16.msra.mxu0 0
    %488 = vmatprep.subr.bf16.mxu0 0
    %489 = vmatpush1.bf16.msra.mxu0 0
    %490 = vmatprep.subr.bf16.mxu0 0
    %491 = vmatpush1.bf16.msra.mxu0 0
    %492 = vmatprep.subr.bf16.mxu0 0
    %493 = vmatpush1.bf16.msra.mxu0 0
    %494 = vmatprep.subr.bf16.mxu0 0
    %495 = vmatpush1.bf16.msra.mxu0 %v468
    %496 = vmatprep.subr.bf16.mxu0 0
    %497 = vmatpush1.bf16.msra.mxu0 %v467
    %498 = vmatprep.subr.bf16.mxu0 0
    %499 = vmatpush1.bf16.msra.mxu0 %v466
    %500 = vmatprep.subr.bf16.mxu0 0
    %501 = vmatpush1.bf16.msra.mxu0 %v465
    %502 = vmatprep.subr.bf16.mxu0 0
    %503 = vmatpush2.bf16.msra.mxu0 0
    %504 = vmatprep.subr.bf16.mxu0 0
    %505 = vmatpush2.bf16.msra.mxu0 0
    %506 = vmatprep.subr.bf16.mxu0 0
    %507 = vmatpush2.bf16.msra.mxu0 0
    %508 = vmatprep.subr.bf16.mxu0 0
    %509 = vmatpush2.bf16.msra.mxu0 0
    %510 = vmatprep.subr.bf16.mxu0 0
    %511 = vmatpush2.bf16.msra.mxu0 0
    %512 = vmatprep.subr.bf16.mxu0 0
    %513 = vmatpush2.bf16.msra.mxu0 0
    %514 = vmatprep.subr.bf16.mxu0 0
    %515 = vmatpush2.bf16.msra.mxu0 0
    %516 = vmatprep.subr.bf16.mxu0 0
    %517 = vmatpush2.bf16.msra.mxu0 0
    %518 = vmatprep.mubr.bf16.mxu0 0
    %519 = vmatmul.mubr.bf16.gmra.mxu0 %v475
    %v520 = vpop.f32.mrf.mxu0
    %v521 = vadd.f32 0.0, %v520
    %v522 = vpop.f32.mrf.mxu0
    %v523 = vpop.f32.mrf.mxu0
    %v524 = vadd.f32 0.0, %v523
    %v525 = vpop.f32.mrf.mxu0
    %526 = vmatprep.mubr.bf16.mxu0 0
    %527 = vmatmul.mubr.bf16.gmra.mxu0 %v478
    %v528 = vpop.f32.mrf.mxu0
    %v529 = vadd.f32 0.0, %v528
    %v530 = vpop.f32.mrf.mxu0
    %v531 = vpop.f32.mrf.mxu0
    %v532 = vadd.f32 0.0, %v531
    %v533 = vpop.f32.mrf.mxu0
    %534 = vmatprep.mubr.bf16.mxu0 0
    %535 = vmatmul.mubr.bf16.gmra.mxu0 %v481
    %v536 = vpop.f32.mrf.mxu0
    %v537 = vadd.f32 0.0, %v536
    %v538 = vpop.f32.mrf.mxu0
    %v539 = vpop.f32.mrf.mxu0
    %v540 = vadd.f32 0.0, %v539
    %v541 = vpop.f32.mrf.mxu0
    %542 = vmatprep.mubr.bf16.mxu0 0
    %543 = vmatmul.mubr.bf16.gmra.mxu0 %v484
    %v544 = vpop.f32.mrf.mxu0
    %v545 = vadd.f32 0.0, %v544
    %v546 = vpop.f32.mrf.mxu0
    %v547 = vpop.f32.mrf.mxu0
    %v548 = vadd.f32 0.0, %v547
    %v549 = vpop.f32.mrf.mxu0
    %550 = vdwg.mxu0
    %v559 = vunpack.c.l.b16 %v433
    %v560 = vunpack.c.l.b16 %v434
    %v561 = vunpack.c.l.b16 %v435
    %v562 = vunpack.c.l.b16 %v436
    %v563 = vunpack.c.l.b16 %v437
    %v564 = vunpack.c.l.b16 %v438
    %v565 = vunpack.c.l.b16 %v439
    %v566 = vunpack.c.l.b16 %v440
    %v567 = vpack.c.b16 %v560, %v559
    %v568 = vpack.c.b16 %v562, %v561
    %v569 = vpack.c.b16 %v564, %v563
    %v570 = vpack.c.b16 %v566, %v565
    %v576 = vsel %vm473, %v417, 0
    %v579 = vsel %vm473, %v418, 0
    %v582 = vsel %vm473, %v419, 0
    %v585 = vsel %vm473, %v420, 0
    %587 = vmatprep.subr.bf16.mxu0 0
    %588 = vmatpush1.bf16.msra.mxu0 0
    %589 = vmatprep.subr.bf16.mxu0 0
    %590 = vmatpush1.bf16.msra.mxu0 0
    %591 = vmatprep.subr.bf16.mxu0 0
    %592 = vmatpush1.bf16.msra.mxu0 0
    %593 = vmatprep.subr.bf16.mxu0 0
    %594 = vmatpush1.bf16.msra.mxu0 0
    %595 = vmatprep.subr.bf16.mxu0 0
    %596 = vmatpush1.bf16.msra.mxu0 %v570
    %597 = vmatprep.subr.bf16.mxu0 0
    %598 = vmatpush1.bf16.msra.mxu0 %v569
    %599 = vmatprep.subr.bf16.mxu0 0
    %600 = vmatpush1.bf16.msra.mxu0 %v568
    %601 = vmatprep.subr.bf16.mxu0 0
    %602 = vmatpush1.bf16.msra.mxu0 %v567
    %603 = vmatprep.subr.bf16.mxu0 0
    %604 = vmatpush2.bf16.msra.mxu0 0
    %605 = vmatprep.subr.bf16.mxu0 0
    %606 = vmatpush2.bf16.msra.mxu0 0
    %607 = vmatprep.subr.bf16.mxu0 0
    %608 = vmatpush2.bf16.msra.mxu0 0
    %609 = vmatprep.subr.bf16.mxu0 0
    %610 = vmatpush2.bf16.msra.mxu0 0
    %611 = vmatprep.subr.bf16.mxu0 0
    %612 = vmatpush2.bf16.msra.mxu0 0
    %613 = vmatprep.subr.bf16.mxu0 0
    %614 = vmatpush2.bf16.msra.mxu0 0
    %615 = vmatprep.subr.bf16.mxu0 0
    %616 = vmatpush2.bf16.msra.mxu0 0
    %617 = vmatprep.subr.bf16.mxu0 0
    %618 = vmatpush2.bf16.msra.mxu0 0
    %619 = vmatprep.mubr.bf16.mxu0 0
    %620 = vmatmul.mubr.bf16.gmra.mxu0 %v576
    %v621 = vpop.f32.mrf.mxu0
    %v622 = vadd.f32 %v521, %v621
    %v623 = vpop.f32.mrf.mxu0
    %v624 = vpop.f32.mrf.mxu0
    %v625 = vadd.f32 %v524, %v624
    %v626 = vpop.f32.mrf.mxu0
    %627 = vmatprep.mubr.bf16.mxu0 0
    %628 = vmatmul.mubr.bf16.gmra.mxu0 %v579
    %v629 = vpop.f32.mrf.mxu0
    %v630 = vadd.f32 %v529, %v629
    %v631 = vpop.f32.mrf.mxu0
    %v632 = vpop.f32.mrf.mxu0
    %v633 = vadd.f32 %v532, %v632
    %v634 = vpop.f32.mrf.mxu0
    %635 = vmatprep.mubr.bf16.mxu0 0
    %636 = vmatmul.mubr.bf16.gmra.mxu0 %v582
    %v637 = vpop.f32.mrf.mxu0
    %v638 = vadd.f32 %v537, %v637
    %v639 = vpop.f32.mrf.mxu0
    %v640 = vpop.f32.mrf.mxu0
    %v641 = vadd.f32 %v540, %v640
    %v642 = vpop.f32.mrf.mxu0
    %643 = vmatprep.mubr.bf16.mxu0 0
    %644 = vmatmul.mubr.bf16.gmra.mxu0 %v585
    %v645 = vpop.f32.mrf.mxu0
    %v646 = vadd.f32 %v545, %v645
    %v647 = vpop.f32.mrf.mxu0
    %v648 = vpop.f32.mrf.mxu0
    %v649 = vadd.f32 %v548, %v648
    %v650 = vpop.f32.mrf.mxu0
    %651 = vdwg.mxu0
    %v653 = vlaneseq
    %v654 = vshrl.u32 %v653, 7
    %v655 = vsub.s32 0, %v654
    %v656 = vrot.slane %v404, %v655
    %v658 = vadd.f32 %v622, %v656
    %v659 = vadd.f32 %v625, %v656
    %v660 = vadd.f32 %v630, %v656
    %v661 = vadd.f32 %v633, %v656
    %v662 = vadd.f32 %v638, %v656
    %v663 = vadd.f32 %v641, %v656
    %v664 = vadd.f32 %v646, %v656
    %v665 = vadd.f32 %v649, %v656
    %v666 = vmax.f32 %v658, 0.0
    %v667 = vmax.f32 %v659, 0.0
    %v668 = vmax.f32 %v660, 0.0
    %v669 = vmax.f32 %v661, 0.0
    %v670 = vmax.f32 %v662, 0.0
    %v671 = vmax.f32 %v663, 0.0
    %v672 = vmax.f32 %v664, 0.0
    %v673 = vmax.f32 %v665, 0.0
    %v674 = vpack.c.bf16 %v667, %v666
    %v675 = vpack.c.bf16 %v669, %v668
    %v676 = vpack.c.bf16 %v671, %v670
    %v677 = vpack.c.bf16 %v673, %v672
    %v678 = vld [vmem:[%s2] sm:$0xff]
    %v679 = vld [vmem:[%s2 + $0x8] sm:$0xff]
    %v680 = vld [vmem:[%s2 + $0x10] sm:$0xff]
    %v681 = vld [vmem:[%s2 + $0x18] sm:$0xff]
    %v682 = vld [vmem:[%s2 + $0x20] sm:$0xff]
    %v683 = vld [vmem:[%s2 + $0x28] sm:$0xff]
    %v684 = vld [vmem:[%s2 + $0x30] sm:$0xff]
    %v685 = vld [vmem:[%s2 + $0x38] sm:$0xff]
    %v686 = vld [vmem:[%s2 + $0x40] sm:$0xff]
    %v687 = vld [vmem:[%s2 + $0x48] sm:$0xff]
    %v688 = vld [vmem:[%s2 + $0x50] sm:$0xff]
    %v689 = vld [vmem:[%s2 + $0x58] sm:$0xff]
    %v690 = vld [vmem:[%s2 + $0x60] sm:$0xff]
    %v691 = vld [vmem:[%s2 + $0x68] sm:$0xff]
    %v692 = vld [vmem:[%s2 + $0x70] sm:$0xff]
    %v693 = vld [vmem:[%s2 + $0x78] sm:$0xff]
    %v695 = vlaneseq
    %v696 = vshrl.u32 %v695, 7
    %v697 = vsub.s32 0, %v696
    %v698 = vrot.slane %v405, %v697
    %v699 = vlaneseq
    %v700 = vshrl.u32 %v699, 7
    %v701 = vsub.s32 1, %v700
    %v702 = vrot.slane %v405, %v701
    %v721 = vunpack.c.l.b16 %v678
    %v722 = vunpack.c.h.b16 %v678
    %v723 = vunpack.c.l.b16 %v679
    %v724 = vunpack.c.h.b16 %v679
    %v725 = vunpack.c.l.b16 %v680
    %v726 = vunpack.c.h.b16 %v680
    %v727 = vunpack.c.l.b16 %v681
    %v728 = vunpack.c.h.b16 %v681
    %v729 = vunpack.c.l.b16 %v682
    %v730 = vunpack.c.h.b16 %v682
    %v731 = vunpack.c.l.b16 %v683
    %v732 = vunpack.c.h.b16 %v683
    %v733 = vunpack.c.l.b16 %v684
    %v734 = vunpack.c.h.b16 %v684
    %v735 = vunpack.c.l.b16 %v685
    %v736 = vunpack.c.h.b16 %v685
    %v737 = vunpack.c.l.b16 %v686
    %v738 = vunpack.c.h.b16 %v686
    %v739 = vunpack.c.l.b16 %v687
    %v740 = vunpack.c.h.b16 %v687
    %v741 = vunpack.c.l.b16 %v688
    %v742 = vunpack.c.h.b16 %v688
    %v743 = vunpack.c.l.b16 %v689
    %v744 = vunpack.c.h.b16 %v689
    %v745 = vunpack.c.l.b16 %v690
    %v746 = vunpack.c.h.b16 %v690
    %v747 = vunpack.c.l.b16 %v691
    %v748 = vunpack.c.h.b16 %v691
    %v749 = vunpack.c.l.b16 %v692
    %v750 = vunpack.c.h.b16 %v692
    %v751 = vunpack.c.l.b16 %v693
    %v752 = vunpack.c.h.b16 %v693
    %v753 = vpack.c.b16 %v723, %v721
    %v754 = vpack.c.b16 %v724, %v722
    %v755 = vpack.c.b16 %v727, %v725
    %v756 = vpack.c.b16 %v728, %v726
    %v757 = vpack.c.b16 %v731, %v729
    %v758 = vpack.c.b16 %v732, %v730
    %v759 = vpack.c.b16 %v735, %v733
    %v760 = vpack.c.b16 %v736, %v734
    %v761 = vpack.c.b16 %v739, %v737
    %v762 = vpack.c.b16 %v740, %v738
    %v763 = vpack.c.b16 %v743, %v741
    %v764 = vpack.c.b16 %v744, %v742
    %v765 = vpack.c.b16 %v747, %v745
    %v766 = vpack.c.b16 %v748, %v746
    %v767 = vpack.c.b16 %v751, %v749
    %v768 = vpack.c.b16 %v752, %v750
    %785 = vmatprep.subr.bf16.mxu0 %v768
    %786 = vmatpush1.bf16.msra.mxu0 %v767
    %787 = vmatprep.subr.bf16.mxu0 %v766
    %788 = vmatpush1.bf16.msra.mxu0 %v765
    %789 = vmatprep.subr.bf16.mxu0 %v764
    %790 = vmatpush1.bf16.msra.mxu0 %v763
    %791 = vmatprep.subr.bf16.mxu0 %v762
    %792 = vmatpush1.bf16.msra.mxu0 %v761
    %793 = vmatprep.subr.bf16.mxu0 %v760
    %794 = vmatpush1.bf16.msra.mxu0 %v759
    %795 = vmatprep.subr.bf16.mxu0 %v758
    %796 = vmatpush1.bf16.msra.mxu0 %v757
    %797 = vmatprep.subr.bf16.mxu0 %v756
    %798 = vmatpush1.bf16.msra.mxu0 %v755
    %799 = vmatprep.subr.bf16.mxu0 %v754
    %800 = vmatpush1.bf16.msra.mxu0 %v753
    %801 = vmatprep.subr.bf16.mxu0 0
    %802 = vmatpush2.bf16.msra.mxu0 0
    %803 = vmatprep.subr.bf16.mxu0 0
    %804 = vmatpush2.bf16.msra.mxu0 0
    %805 = vmatprep.subr.bf16.mxu0 0
    %806 = vmatpush2.bf16.msra.mxu0 0
    %807 = vmatprep.subr.bf16.mxu0 0
    %808 = vmatpush2.bf16.msra.mxu0 0
    %809 = vmatprep.subr.bf16.mxu0 0
    %810 = vmatpush2.bf16.msra.mxu0 0
    %811 = vmatprep.subr.bf16.mxu0 0
    %812 = vmatpush2.bf16.msra.mxu0 0
    %813 = vmatprep.subr.bf16.mxu0 0
    %814 = vmatpush2.bf16.msra.mxu0 0
    %815 = vmatprep.subr.bf16.mxu0 0
    %816 = vmatpush2.bf16.msra.mxu0 0
    %817 = vmatprep.mubr.bf16.mxu0 0
    %818 = vmatmul.mubr.bf16.gmra.mxu0 %v674
    %v819 = vpop.f32.mrf.mxu0
    %v820 = vadd.f32 %v698, %v819
    %v821 = vpop.f32.mrf.mxu0
    %v822 = vadd.f32 %v702, %v821
    %v823 = vpop.f32.mrf.mxu0
    %v824 = vadd.f32 %v698, %v823
    %v825 = vpop.f32.mrf.mxu0
    %v826 = vadd.f32 %v702, %v825
    %827 = vmatprep.mubr.bf16.mxu0 0
    %828 = vmatmul.mubr.bf16.gmra.mxu0 %v675
    %v829 = vpop.f32.mrf.mxu0
    %v830 = vadd.f32 %v698, %v829
    %v831 = vpop.f32.mrf.mxu0
    %v832 = vadd.f32 %v702, %v831
    %v833 = vpop.f32.mrf.mxu0
    %v834 = vadd.f32 %v698, %v833
    %v835 = vpop.f32.mrf.mxu0
    %v836 = vadd.f32 %v702, %v835
    %837 = vmatprep.mubr.bf16.mxu0 0
    %838 = vmatmul.mubr.bf16.gmra.mxu0 %v676
    %v839 = vpop.f32.mrf.mxu0
    %v840 = vadd.f32 %v698, %v839
    %v841 = vpop.f32.mrf.mxu0
    %v842 = vadd.f32 %v702, %v841
    %v843 = vpop.f32.mrf.mxu0
    %v844 = vadd.f32 %v698, %v843
    %v845 = vpop.f32.mrf.mxu0
    %v846 = vadd.f32 %v702, %v845
    %847 = vmatprep.mubr.bf16.mxu0 0
    %848 = vmatmul.mubr.bf16.gmra.mxu0 %v677
    %v849 = vpop.f32.mrf.mxu0
    %v850 = vadd.f32 %v698, %v849
    %v851 = vpop.f32.mrf.mxu0
    %v852 = vadd.f32 %v702, %v851
    %v853 = vpop.f32.mrf.mxu0
    %v854 = vadd.f32 %v698, %v853
    %v855 = vpop.f32.mrf.mxu0
    %v856 = vadd.f32 %v702, %v855
    %857 = vdwg.mxu0
    %v858 = vmax.f32 %v820, 0.0
    %v859 = vmax.f32 %v822, 0.0
    %v860 = vmax.f32 %v824, 0.0
    %v861 = vmax.f32 %v826, 0.0
    %v862 = vmax.f32 %v830, 0.0
    %v863 = vmax.f32 %v832, 0.0
    %v864 = vmax.f32 %v834, 0.0
    %v865 = vmax.f32 %v836, 0.0
    %v866 = vmax.f32 %v840, 0.0
    %v867 = vmax.f32 %v842, 0.0
    %v868 = vmax.f32 %v844, 0.0
    %v869 = vmax.f32 %v846, 0.0
    %v870 = vmax.f32 %v850, 0.0
    %v871 = vmax.f32 %v852, 0.0
    %v872 = vmax.f32 %v854, 0.0
    %v873 = vmax.f32 %v856, 0.0
    %v874 = vpack.c.bf16 %v860, %v858
    %v875 = vpack.c.bf16 %v861, %v859
    %v876 = vpack.c.bf16 %v864, %v862
    %v877 = vpack.c.bf16 %v865, %v863
    %v878 = vpack.c.bf16 %v868, %v866
    %v879 = vpack.c.bf16 %v869, %v867
    %v880 = vpack.c.bf16 %v872, %v870
    %v881 = vpack.c.bf16 %v873, %v871
    %v882 = vld [vmem:[#allocation25] sm:$0xff]
    %v883 = vld [vmem:[#allocation25 + $0x8] sm:$0xff]
    %v884 = vld [vmem:[#allocation25 + $0x10] sm:$0xff]
    %v885 = vld [vmem:[#allocation25 + $0x18] sm:$0xff]
    %v886 = vld [vmem:[#allocation25 + $0x20] sm:$0xff]
    %v887 = vld [vmem:[#allocation25 + $0x28] sm:$0xff]
    %v888 = vld [vmem:[#allocation25 + $0x30] sm:$0xff]
    %v889 = vld [vmem:[#allocation25 + $0x38] sm:$0xff]
    %v890 = vld [vmem:[#allocation25 + $0x40] sm:$0xff]
    %v891 = vld [vmem:[#allocation25 + $0x48] sm:$0xff]
    %v892 = vld [vmem:[#allocation25 + $0x50] sm:$0xff]
    %v893 = vld [vmem:[#allocation25 + $0x58] sm:$0xff]
    %v894 = vld [vmem:[#allocation25 + $0x60] sm:$0xff]
    %v895 = vld [vmem:[#allocation25 + $0x68] sm:$0xff]
    %v896 = vld [vmem:[#allocation25 + $0x70] sm:$0xff]
    %v897 = vld [vmem:[#allocation25 + $0x78] sm:$0xff]
    %v898 = vld [vmem:[#allocation25 + $0x80] sm:$0xff]
    %v899 = vld [vmem:[#allocation25 + $0x88] sm:$0xff]
    %v900 = vld [vmem:[#allocation25 + $0x90] sm:$0xff]
    %v901 = vld [vmem:[#allocation25 + $0x98] sm:$0xff]
    %v902 = vld [vmem:[#allocation25 + $0xa0] sm:$0xff]
    %v903 = vld [vmem:[#allocation25 + $0xa8] sm:$0xff]
    %v904 = vld [vmem:[#allocation25 + $0xb0] sm:$0xff]
    %v905 = vld [vmem:[#allocation25 + $0xb8] sm:$0xff]
    %v906 = vld [vmem:[#allocation25 + $0xc0] sm:$0xff]
    %v907 = vld [vmem:[#allocation25 + $0xc8] sm:$0xff]
    %v908 = vld [vmem:[#allocation25 + $0xd0] sm:$0xff]
    %v909 = vld [vmem:[#allocation25 + $0xd8] sm:$0xff]
    %v910 = vld [vmem:[#allocation25 + $0xe0] sm:$0xff]
    %v911 = vld [vmem:[#allocation25 + $0xe8] sm:$0xff]
    %v912 = vld [vmem:[#allocation25 + $0xf0] sm:$0xff]
    %v913 = vld [vmem:[#allocation25 + $0xf8] sm:$0xff]
    %v914 = vld [vmem:[#allocation25 + $0x100] sm:$0xff]
    %v915 = vld [vmem:[#allocation25 + $0x108] sm:$0xff]
    %v916 = vld [vmem:[#allocation25 + $0x110] sm:$0xff]
    %v917 = vld [vmem:[#allocation25 + $0x118] sm:$0xff]
    %v918 = vld [vmem:[#allocation25 + $0x120] sm:$0xff]
    %v919 = vld [vmem:[#allocation25 + $0x128] sm:$0xff]
    %v920 = vld [vmem:[#allocation25 + $0x130] sm:$0xff]
    %v921 = vld [vmem:[#allocation25 + $0x138] sm:$0xff]
    %v922 = vld [vmem:[#allocation25 + $0x140] sm:$0xff]
    %v923 = vld [vmem:[#allocation25 + $0x148] sm:$0xff]
    %v924 = vld [vmem:[#allocation25 + $0x150] sm:$0xff]
    %v925 = vld [vmem:[#allocation25 + $0x158] sm:$0xff]
    %v926 = vld [vmem:[#allocation25 + $0x160] sm:$0xff]
    %v927 = vld [vmem:[#allocation25 + $0x168] sm:$0xff]
    %v928 = vld [vmem:[#allocation25 + $0x170] sm:$0xff]
    %v929 = vld [vmem:[#allocation25 + $0x178] sm:$0xff]
    %v930 = vld [vmem:[#allocation25 + $0x180] sm:$0xff]
    %v931 = vld [vmem:[#allocation25 + $0x188] sm:$0xff]
    %v932 = vld [vmem:[#allocation25 + $0x190] sm:$0xff]
    %v933 = vld [vmem:[#allocation25 + $0x198] sm:$0xff]
    %v934 = vld [vmem:[#allocation25 + $0x1a0] sm:$0xff]
    %v935 = vld [vmem:[#allocation25 + $0x1a8] sm:$0xff]
    %v936 = vld [vmem:[#allocation25 + $0x1b0] sm:$0xff]
    %v937 = vld [vmem:[#allocation25 + $0x1b8] sm:$0xff]
    %v938 = vld [vmem:[#allocation25 + $0x1c0] sm:$0xff]
    %v939 = vld [vmem:[#allocation25 + $0x1c8] sm:$0xff]
    %v940 = vld [vmem:[#allocation25 + $0x1d0] sm:$0xff]
    %v941 = vld [vmem:[#allocation25 + $0x1d8] sm:$0xff]
    %v942 = vld [vmem:[#allocation25 + $0x1e0] sm:$0xff]
    %v943 = vld [vmem:[#allocation25 + $0x1e8] sm:$0xff]
    %v944 = vld [vmem:[#allocation25 + $0x1f0] sm:$0xff]
    %v945 = vld [vmem:[#allocation25 + $0x1f8] sm:$0xff]
    %v947 = vlaneseq
    %v948 = vshrl.u32 %v947, 7
    %v949 = vsub.s32 0, %v948
    %v950 = vrot.slane %v406, %v949
    %v951 = vlaneseq
    %v952 = vshrl.u32 %v951, 7
    %v953 = vsub.s32 1, %v952
    %v954 = vrot.slane %v406, %v953
    %v955 = vlaneseq
    %v956 = vshrl.u32 %v955, 7
    %v957 = vsub.s32 2, %v956
    %v958 = vrot.slane %v406, %v957
    %v959 = vlaneseq
    %v960 = vshrl.u32 %v959, 7
    %v961 = vsub.s32 3, %v960
    %v962 = vrot.slane %v406, %v961
    %v1031 = vunpack.c.l.b16 %v882
    %v1032 = vunpack.c.h.b16 %v882
    %v1033 = vunpack.c.l.b16 %v883
    %v1034 = vunpack.c.h.b16 %v883
    %v1035 = vunpack.c.l.b16 %v884
    %v1036 = vunpack.c.h.b16 %v884
    %v1037 = vunpack.c.l.b16 %v885
    %v1038 = vunpack.c.h.b16 %v885
    %v1039 = vunpack.c.l.b16 %v886
    %v1040 = vunpack.c.h.b16 %v886
    %v1041 = vunpack.c.l.b16 %v887
    %v1042 = vunpack.c.h.b16 %v887
    %v1043 = vunpack.c.l.b16 %v888
    %v1044 = vunpack.c.h.b16 %v888
    %v1045 = vunpack.c.l.b16 %v889
    %v1046 = vunpack.c.h.b16 %v889
    %v1047 = vunpack.c.l.b16 %v890
    %v1048 = vunpack.c.h.b16 %v890
    %v1049 = vunpack.c.l.b16 %v891
    %v1050 = vunpack.c.h.b16 %v891
    %v1051 = vunpack.c.l.b16 %v892
    %v1052 = vunpack.c.h.b16 %v892
    %v1053 = vunpack.c.l.b16 %v893
    %v1054 = vunpack.c.h.b16 %v893
    %v1055 = vunpack.c.l.b16 %v894
    %v1056 = vunpack.c.h.b16 %v894
    %v1057 = vunpack.c.l.b16 %v895
    %v1058 = vunpack.c.h.b16 %v895
    %v1059 = vunpack.c.l.b16 %v896
    %v1060 = vunpack.c.h.b16 %v896
    %v1061 = vunpack.c.l.b16 %v897
    %v1062 = vunpack.c.h.b16 %v897
    %v1063 = vunpack.c.l.b16 %v898
    %v1064 = vunpack.c.h.b16 %v898
    %v1065 = vunpack.c.l.b16 %v899
    %v1066 = vunpack.c.h.b16 %v899
    %v1067 = vunpack.c.l.b16 %v900
    %v1068 = vunpack.c.h.b16 %v900
    %v1069 = vunpack.c.l.b16 %v901
    %v1070 = vunpack.c.h.b16 %v901
    %v1071 = vunpack.c.l.b16 %v902
    %v1072 = vunpack.c.h.b16 %v902
    %v1073 = vunpack.c.l.b16 %v903
    %v1074 = vunpack.c.h.b16 %v903
    %v1075 = vunpack.c.l.b16 %v904
    %v1076 = vunpack.c.h.b16 %v904
    %v1077 = vunpack.c.l.b16 %v905
    %v1078 = vunpack.c.h.b16 %v905
    %v1079 = vunpack.c.l.b16 %v906
    %v1080 = vunpack.c.h.b16 %v906
    %v1081 = vunpack.c.l.b16 %v907
    %v1082 = vunpack.c.h.b16 %v907
    %v1083 = vunpack.c.l.b16 %v908
    %v1084 = vunpack.c.h.b16 %v908
    %v1085 = vunpack.c.l.b16 %v909
    %v1086 = vunpack.c.h.b16 %v909
    %v1087 = vunpack.c.l.b16 %v910
    %v1088 = vunpack.c.h.b16 %v910
    %v1089 = vunpack.c.l.b16 %v911
    %v1090 = vunpack.c.h.b16 %v911
    %v1091 = vunpack.c.l.b16 %v912
    %v1092 = vunpack.c.h.b16 %v912
    %v1093 = vunpack.c.l.b16 %v913
    %v1094 = vunpack.c.h.b16 %v913
    %v1095 = vunpack.c.l.b16 %v914
    %v1096 = vunpack.c.h.b16 %v914
    %v1097 = vunpack.c.l.b16 %v915
    %v1098 = vunpack.c.h.b16 %v915
    %v1099 = vunpack.c.l.b16 %v916
    %v1100 = vunpack.c.h.b16 %v916
    %v1101 = vunpack.c.l.b16 %v917
    %v1102 = vunpack.c.h.b16 %v917
    %v1103 = vunpack.c.l.b16 %v918
    %v1104 = vunpack.c.h.b16 %v918
    %v1105 = vunpack.c.l.b16 %v919
    %v1106 = vunpack.c.h.b16 %v919
    %v1107 = vunpack.c.l.b16 %v920
    %v1108 = vunpack.c.h.b16 %v920
    %v1109 = vunpack.c.l.b16 %v921
    %v1110 = vunpack.c.h.b16 %v921
    %v1111 = vunpack.c.l.b16 %v922
    %v1112 = vunpack.c.h.b16 %v922
    %v1113 = vunpack.c.l.b16 %v923
    %v1114 = vunpack.c.h.b16 %v923
    %v1115 = vunpack.c.l.b16 %v924
    %v1116 = vunpack.c.h.b16 %v924
    %v1117 = vunpack.c.l.b16 %v925
    %v1118 = vunpack.c.h.b16 %v925
    %v1119 = vunpack.c.l.b16 %v926
    %v1120 = vunpack.c.h.b16 %v926
    %v1121 = vunpack.c.l.b16 %v927
    %v1122 = vunpack.c.h.b16 %v927
    %v1123 = vunpack.c.l.b16 %v928
    %v1124 = vunpack.c.h.b16 %v928
    %v1125 = vunpack.c.l.b16 %v929
    %v1126 = vunpack.c.h.b16 %v929
    %v1127 = vunpack.c.l.b16 %v930
    %v1128 = vunpack.c.h.b16 %v930
    %v1129 = vunpack.c.l.b16 %v931
    %v1130 = vunpack.c.h.b16 %v931
    %v1131 = vunpack.c.l.b16 %v932
    %v1132 = vunpack.c.h.b16 %v932
    %v1133 = vunpack.c.l.b16 %v933
    %v1134 = vunpack.c.h.b16 %v933
    %v1135 = vunpack.c.l.b16 %v934
    %v1136 = vunpack.c.h.b16 %v934
    %v1137 = vunpack.c.l.b16 %v935
    %v1138 = vunpack.c.h.b16 %v935
    %v1139 = vunpack.c.l.b16 %v936
    %v1140 = vunpack.c.h.b16 %v936
    %v1141 = vunpack.c.l.b16 %v937
    %v1142 = vunpack.c.h.b16 %v937
    %v1143 = vunpack.c.l.b16 %v938
    %v1144 = vunpack.c.h.b16 %v938
    %v1145 = vunpack.c.l.b16 %v939
    %v1146 = vunpack.c.h.b16 %v939
    %v1147 = vunpack.c.l.b16 %v940
    %v1148 = vunpack.c.h.b16 %v940
    %v1149 = vunpack.c.l.b16 %v941
    %v1150 = vunpack.c.h.b16 %v941
    %v1151 = vunpack.c.l.b16 %v942
    %v1152 = vunpack.c.h.b16 %v942
    %v1153 = vunpack.c.l.b16 %v943
    %v1154 = vunpack.c.h.b16 %v943
    %v1155 = vunpack.c.l.b16 %v944
    %v1156 = vunpack.c.h.b16 %v944
    %v1157 = vunpack.c.l.b16 %v945
    %v1158 = vunpack.c.h.b16 %v945
    %v1159 = vpack.c.b16 %v1035, %v1031
    %v1160 = vpack.c.b16 %v1036, %v1032
    %v1161 = vpack.c.b16 %v1037, %v1033
    %v1162 = vpack.c.b16 %v1038, %v1034
    %v1163 = vpack.c.b16 %v1043, %v1039
    %v1164 = vpack.c.b16 %v1044, %v1040
    %v1165 = vpack.c.b16 %v1045, %v1041
    %v1166 = vpack.c.b16 %v1046, %v1042
    %v1167 = vpack.c.b16 %v1051, %v1047
    %v1168 = vpack.c.b16 %v1052, %v1048
    %v1169 = vpack.c.b16 %v1053, %v1049
    %v1170 = vpack.c.b16 %v1054, %v1050
    %v1171 = vpack.c.b16 %v1059, %v1055
    %v1172 = vpack.c.b16 %v1060, %v1056
    %v1173 = vpack.c.b16 %v1061, %v1057
    %v1174 = vpack.c.b16 %v1062, %v1058
    %v1175 = vpack.c.b16 %v1067, %v1063
    %v1176 = vpack.c.b16 %v1068, %v1064
    %v1177 = vpack.c.b16 %v1069, %v1065
    %v1178 = vpack.c.b16 %v1070, %v1066
    %v1179 = vpack.c.b16 %v1075, %v1071
    %v1180 = vpack.c.b16 %v1076, %v1072
    %v1181 = vpack.c.b16 %v1077, %v1073
    %v1182 = vpack.c.b16 %v1078, %v1074
    %v1183 = vpack.c.b16 %v1083, %v1079
    %v1184 = vpack.c.b16 %v1084, %v1080
    %v1185 = vpack.c.b16 %v1085, %v1081
    %v1186 = vpack.c.b16 %v1086, %v1082
    %v1187 = vpack.c.b16 %v1091, %v1087
    %v1188 = vpack.c.b16 %v1092, %v1088
    %v1189 = vpack.c.b16 %v1093, %v1089
    %v1190 = vpack.c.b16 %v1094, %v1090
    %v1191 = vpack.c.b16 %v1099, %v1095
    %v1192 = vpack.c.b16 %v1100, %v1096
    %v1193 = vpack.c.b16 %v1101, %v1097
    %v1194 = vpack.c.b16 %v1102, %v1098
    %v1195 = vpack.c.b16 %v1107, %v1103
    %v1196 = vpack.c.b16 %v1108, %v1104
    %v1197 = vpack.c.b16 %v1109, %v1105
    %v1198 = vpack.c.b16 %v1110, %v1106
    %v1199 = vpack.c.b16 %v1115, %v1111
    %v1200 = vpack.c.b16 %v1116, %v1112
    %v1201 = vpack.c.b16 %v1117, %v1113
    %v1202 = vpack.c.b16 %v1118, %v1114
    %v1203 = vpack.c.b16 %v1123, %v1119
    %v1204 = vpack.c.b16 %v1124, %v1120
    %v1205 = vpack.c.b16 %v1125, %v1121
    %v1206 = vpack.c.b16 %v1126, %v1122
    %v1207 = vpack.c.b16 %v1131, %v1127
    %v1208 = vpack.c.b16 %v1132, %v1128
    %v1209 = vpack.c.b16 %v1133, %v1129
    %v1210 = vpack.c.b16 %v1134, %v1130
    %v1211 = vpack.c.b16 %v1139, %v1135
    %v1212 = vpack.c.b16 %v1140, %v1136
    %v1213 = vpack.c.b16 %v1141, %v1137
    %v1214 = vpack.c.b16 %v1142, %v1138
    %v1215 = vpack.c.b16 %v1147, %v1143
    %v1216 = vpack.c.b16 %v1148, %v1144
    %v1217 = vpack.c.b16 %v1149, %v1145
    %v1218 = vpack.c.b16 %v1150, %v1146
    %v1219 = vpack.c.b16 %v1155, %v1151
    %v1220 = vpack.c.b16 %v1156, %v1152
    %v1221 = vpack.c.b16 %v1157, %v1153
    %v1222 = vpack.c.b16 %v1158, %v1154
    %1287 = vmatprep.subr.bf16.mxu0 %v1188
    %1288 = vmatpush1.bf16.msra.mxu0 %v1187
    %1289 = vmatprep.subr.bf16.mxu0 %v1184
    %1290 = vmatpush1.bf16.msra.mxu0 %v1183
    %1291 = vmatprep.subr.bf16.mxu0 %v1180
    %1292 = vmatpush1.bf16.msra.mxu0 %v1179
    %1293 = vmatprep.subr.bf16.mxu0 %v1176
    %1294 = vmatpush1.bf16.msra.mxu0 %v1175
    %1295 = vmatprep.subr.bf16.mxu0 %v1172
    %1296 = vmatpush1.bf16.msra.mxu0 %v1171
    %1297 = vmatprep.subr.bf16.mxu0 %v1168
    %1298 = vmatpush1.bf16.msra.mxu0 %v1167
    %1299 = vmatprep.subr.bf16.mxu0 %v1164
    %1300 = vmatpush1.bf16.msra.mxu0 %v1163
    %1301 = vmatprep.subr.bf16.mxu0 %v1160
    %1302 = vmatpush1.bf16.msra.mxu0 %v1159
    %1303 = vmatprep.subr.bf16.mxu0 %v1220
    %1304 = vmatpush2.bf16.msra.mxu0 %v1219
    %1305 = vmatprep.subr.bf16.mxu0 %v1216
    %1306 = vmatpush2.bf16.msra.mxu0 %v1215
    %1307 = vmatprep.subr.bf16.mxu0 %v1212
    %1308 = vmatpush2.bf16.msra.mxu0 %v1211
    %1309 = vmatprep.subr.bf16.mxu0 %v1208
    %1310 = vmatpush2.bf16.msra.mxu0 %v1207
    %1311 = vmatprep.subr.bf16.mxu0 %v1204
    %1312 = vmatpush2.bf16.msra.mxu0 %v1203
    %1313 = vmatprep.subr.bf16.mxu0 %v1200
    %1314 = vmatpush2.bf16.msra.mxu0 %v1199
    %1315 = vmatprep.subr.bf16.mxu0 %v1196
    %1316 = vmatpush2.bf16.msra.mxu0 %v1195
    %1317 = vmatprep.subr.bf16.mxu0 %v1192
    %1318 = vmatpush2.bf16.msra.mxu0 %v1191
    %1319 = vmatprep.mubr.bf16.mxu0 %v875
    %1320 = vmatmul.mubr.bf16.gmra.mxu0 %v874
    %v1321 = vpop.f32.mrf.mxu0
    %v1322 = vadd.f32 %v950, %v1321
    %v1323 = vpop.f32.mrf.mxu0
    %v1324 = vadd.f32 %v954, %v1323
    %v1325 = vpop.f32.mrf.mxu0
    %v1326 = vadd.f32 %v950, %v1325
    %v1327 = vpop.f32.mrf.mxu0
    %v1328 = vadd.f32 %v954, %v1327
    %1329 = vmatprep.mubr.bf16.mxu0 %v877
    %1330 = vmatmul.mubr.bf16.gmra.mxu0 %v876
    %v1331 = vpop.f32.mrf.mxu0
    %v1332 = vadd.f32 %v950, %v1331
    %v1333 = vpop.f32.mrf.mxu0
    %v1334 = vadd.f32 %v954, %v1333
    %v1335 = vpop.f32.mrf.mxu0
    %v1336 = vadd.f32 %v950, %v1335
    %v1337 = vpop.f32.mrf.mxu0
    %v1338 = vadd.f32 %v954, %v1337
    %1339 = vmatprep.mubr.bf16.mxu0 %v879
    %1340 = vmatmul.mubr.bf16.gmra.mxu0 %v878
    %v1341 = vpop.f32.mrf.mxu0
    %v1342 = vadd.f32 %v950, %v1341
    %v1343 = vpop.f32.mrf.mxu0
    %v1344 = vadd.f32 %v954, %v1343
    %v1345 = vpop.f32.mrf.mxu0
    %v1346 = vadd.f32 %v950, %v1345
    %v1347 = vpop.f32.mrf.mxu0
    %v1348 = vadd.f32 %v954, %v1347
    %1349 = vmatprep.mubr.bf16.mxu0 %v881
    %1350 = vmatmul.mubr.bf16.gmra.mxu0 %v880
    %v1351 = vpop.f32.mrf.mxu0
    %v1352 = vadd.f32 %v950, %v1351
    %v1353 = vpop.f32.mrf.mxu0
    %v1354 = vadd.f32 %v954, %v1353
    %v1355 = vpop.f32.mrf.mxu0
    %v1356 = vadd.f32 %v950, %v1355
    %v1357 = vpop.f32.mrf.mxu0
    %v1358 = vadd.f32 %v954, %v1357
    %1359 = vdwg.mxu0
    %1360 = vmatprep.subr.bf16.mxu0 %v1190
    %1361 = vmatpush1.bf16.msra.mxu0 %v1189
    %1362 = vmatprep.subr.bf16.mxu0 %v1186
    %1363 = vmatpush1.bf16.msra.mxu0 %v1185
    %1364 = vmatprep.subr.bf16.mxu0 %v1182
    %1365 = vmatpush1.bf16.msra.mxu0 %v1181
    %1366 = vmatprep.subr.bf16.mxu0 %v1178
    %1367 = vmatpush1.bf16.msra.mxu0 %v1177
    %1368 = vmatprep.subr.bf16.mxu0 %v1174
    %1369 = vmatpush1.bf16.msra.mxu0 %v1173
    %1370 = vmatprep.subr.bf16.mxu0 %v1170
    %1371 = vmatpush1.bf16.msra.mxu0 %v1169
    %1372 = vmatprep.subr.bf16.mxu0 %v1166
    %1373 = vmatpush1.bf16.msra.mxu0 %v1165
    %1374 = vmatprep.subr.bf16.mxu0 %v1162
    %1375 = vmatpush1.bf16.msra.mxu0 %v1161
    %1376 = vmatprep.subr.bf16.mxu0 %v1222
    %1377 = vmatpush2.bf16.msra.mxu0 %v1221
    %1378 = vmatprep.subr.bf16.mxu0 %v1218
    %1379 = vmatpush2.bf16.msra.mxu0 %v1217
    %1380 = vmatprep.subr.bf16.mxu0 %v1214
    %1381 = vmatpush2.bf16.msra.mxu0 %v1213
    %1382 = vmatprep.subr.bf16.mxu0 %v1210
    %1383 = vmatpush2.bf16.msra.mxu0 %v1209
    %1384 = vmatprep.subr.bf16.mxu0 %v1206
    %1385 = vmatpush2.bf16.msra.mxu0 %v1205
    %1386 = vmatprep.subr.bf16.mxu0 %v1202
    %1387 = vmatpush2.bf16.msra.mxu0 %v1201
    %1388 = vmatprep.subr.bf16.mxu0 %v1198
    %1389 = vmatpush2.bf16.msra.mxu0 %v1197
    %1390 = vmatprep.subr.bf16.mxu0 %v1194
    %1391 = vmatpush2.bf16.msra.mxu0 %v1193
    %1392 = vmatprep.mubr.bf16.mxu0 %v875
    %1393 = vmatmul.mubr.bf16.gmra.mxu0 %v874
    %v1394 = vpop.f32.mrf.mxu0
    %v1395 = vadd.f32 %v958, %v1394
    %v1396 = vpop.f32.mrf.mxu0
    %v1397 = vadd.f32 %v962, %v1396
    %v1398 = vpop.f32.mrf.mxu0
    %v1399 = vadd.f32 %v958, %v1398
    %v1400 = vpop.f32.mrf.mxu0
    %v1401 = vadd.f32 %v962, %v1400
    %1402 = vmatprep.mubr.bf16.mxu0 %v877
    %1403 = vmatmul.mubr.bf16.gmra.mxu0 %v876
    %v1404 = vpop.f32.mrf.mxu0
    %v1405 = vadd.f32 %v958, %v1404
    %v1406 = vpop.f32.mrf.mxu0
    %v1407 = vadd.f32 %v962, %v1406
    %v1408 = vpop.f32.mrf.mxu0
    %v1409 = vadd.f32 %v958, %v1408
    %v1410 = vpop.f32.mrf.mxu0
    %v1411 = vadd.f32 %v962, %v1410
    %1412 = vmatprep.mubr.bf16.mxu0 %v879
    %1413 = vmatmul.mubr.bf16.gmra.mxu0 %v878
    %v1414 = vpop.f32.mrf.mxu0
    %v1415 = vadd.f32 %v958, %v1414
    %v1416 = vpop.f32.mrf.mxu0
    %v1417 = vadd.f32 %v962, %v1416
    %v1418 = vpop.f32.mrf.mxu0
    %v1419 = vadd.f32 %v958, %v1418
    %v1420 = vpop.f32.mrf.mxu0
    %v1421 = vadd.f32 %v962, %v1420
    %1422 = vmatprep.mubr.bf16.mxu0 %v881
    %1423 = vmatmul.mubr.bf16.gmra.mxu0 %v880
    %v1424 = vpop.f32.mrf.mxu0
    %v1425 = vadd.f32 %v958, %v1424
    %v1426 = vpop.f32.mrf.mxu0
    %v1427 = vadd.f32 %v962, %v1426
    %v1428 = vpop.f32.mrf.mxu0
    %v1429 = vadd.f32 %v958, %v1428
    %v1430 = vpop.f32.mrf.mxu0
    %v1431 = vadd.f32 %v962, %v1430
    %1432 = vdwg.mxu0
    %v1433 = vmax.f32 %v1322, 0.0
    %v1434 = vmax.f32 %v1324, 0.0
    %v1435 = vmax.f32 %v1395, 0.0
    %v1436 = vmax.f32 %v1397, 0.0
    %v1437 = vmax.f32 %v1326, 0.0
    %v1438 = vmax.f32 %v1328, 0.0
    %v1439 = vmax.f32 %v1399, 0.0
    %v1440 = vmax.f32 %v1401, 0.0
    %v1441 = vmax.f32 %v1332, 0.0
    %v1442 = vmax.f32 %v1334, 0.0
    %v1443 = vmax.f32 %v1405, 0.0
    %v1444 = vmax.f32 %v1407, 0.0
    %v1445 = vmax.f32 %v1336, 0.0
    %v1446 = vmax.f32 %v1338, 0.0
    %v1447 = vmax.f32 %v1409, 0.0
    %v1448 = vmax.f32 %v1411, 0.0
    %v1449 = vmax.f32 %v1342, 0.0
    %v1450 = vmax.f32 %v1344, 0.0
    %v1451 = vmax.f32 %v1415, 0.0
    %v1452 = vmax.f32 %v1417, 0.0
    %v1453 = vmax.f32 %v1346, 0.0
    %v1454 = vmax.f32 %v1348, 0.0
    %v1455 = vmax.f32 %v1419, 0.0
    %v1456 = vmax.f32 %v1421, 0.0
    %v1457 = vmax.f32 %v1352, 0.0
    %v1458 = vmax.f32 %v1354, 0.0
    %v1459 = vmax.f32 %v1425, 0.0
    %v1460 = vmax.f32 %v1427, 0.0
    %v1461 = vmax.f32 %v1356, 0.0
    %v1462 = vmax.f32 %v1358, 0.0
    %v1463 = vmax.f32 %v1429, 0.0
    %v1464 = vmax.f32 %v1431, 0.0
    %v1465 = vpack.c.bf16 %v1437, %v1433
    %v1466 = vpack.c.bf16 %v1438, %v1434
    %v1467 = vpack.c.bf16 %v1439, %v1435
    %v1468 = vpack.c.bf16 %v1440, %v1436
    %v1469 = vpack.c.bf16 %v1445, %v1441
    %v1470 = vpack.c.bf16 %v1446, %v1442
    %v1471 = vpack.c.bf16 %v1447, %v1443
    %v1472 = vpack.c.bf16 %v1448, %v1444
    %v1473 = vpack.c.bf16 %v1453, %v1449
    %v1474 = vpack.c.bf16 %v1454, %v1450
    %v1475 = vpack.c.bf16 %v1455, %v1451
    %v1476 = vpack.c.bf16 %v1456, %v1452
    %v1477 = vpack.c.bf16 %v1461, %v1457
    %v1478 = vpack.c.bf16 %v1462, %v1458
    %v1479 = vpack.c.bf16 %v1463, %v1459
    %v1480 = vpack.c.bf16 %v1464, %v1460
    %v1481 = vld [vmem:[#allocation27] sm:$0xf]
    %v1482 = vld [vmem:[#allocation27 + $0x4] sm:$0xf]
    %v1483 = vld [vmem:[#allocation27 + $0x8] sm:$0xf]
    %v1484 = vld [vmem:[#allocation27 + $0xc] sm:$0xf]
    %v1485 = vld [vmem:[#allocation27 + $0x10] sm:$0xf]
    %v1486 = vld [vmem:[#allocation27 + $0x14] sm:$0xf]
    %v1487 = vld [vmem:[#allocation27 + $0x18] sm:$0xf]
    %v1488 = vld [vmem:[#allocation27 + $0x1c] sm:$0xf]
    %v1489 = vld [vmem:[#allocation27 + $0x20] sm:$0xf]
    %v1490 = vld [vmem:[#allocation27 + $0x24] sm:$0xf]
    %v1491 = vld [vmem:[#allocation27 + $0x28] sm:$0xf]
    %v1492 = vld [vmem:[#allocation27 + $0x2c] sm:$0xf]
    %v1493 = vld [vmem:[#allocation27 + $0x30] sm:$0xf]
    %v1494 = vld [vmem:[#allocation27 + $0x34] sm:$0xf]
    %v1495 = vld [vmem:[#allocation27 + $0x38] sm:$0xf]
    %v1496 = vld [vmem:[#allocation27 + $0x3c] sm:$0xf]
    %v1497 = vld [vmem:[#allocation27 + $0x40] sm:$0xf]
    %v1498 = vld [vmem:[#allocation27 + $0x44] sm:$0xf]
    %v1499 = vld [vmem:[#allocation27 + $0x48] sm:$0xf]
    %v1500 = vld [vmem:[#allocation27 + $0x4c] sm:$0xf]
    %v1501 = vld [vmem:[#allocation27 + $0x50] sm:$0xf]
    %v1502 = vld [vmem:[#allocation27 + $0x54] sm:$0xf]
    %v1503 = vld [vmem:[#allocation27 + $0x58] sm:$0xf]
    %v1504 = vld [vmem:[#allocation27 + $0x5c] sm:$0xf]
    %v1505 = vld [vmem:[#allocation27 + $0x60] sm:$0xf]
    %v1506 = vld [vmem:[#allocation27 + $0x64] sm:$0xf]
    %v1507 = vld [vmem:[#allocation27 + $0x68] sm:$0xf]
    %v1508 = vld [vmem:[#allocation27 + $0x6c] sm:$0xf]
    %v1509 = vld [vmem:[#allocation27 + $0x70] sm:$0xf]
    %v1510 = vld [vmem:[#allocation27 + $0x74] sm:$0xf]
    %v1511 = vld [vmem:[#allocation27 + $0x78] sm:$0xf]
    %v1512 = vld [vmem:[#allocation27 + $0x7c] sm:$0xf]
    %v1513 = vld [vmem:[#allocation27 + $0x80] sm:$0xf]
    %v1514 = vld [vmem:[#allocation27 + $0x84] sm:$0xf]
    %v1515 = vld [vmem:[#allocation27 + $0x88] sm:$0xf]
    %v1516 = vld [vmem:[#allocation27 + $0x8c] sm:$0xf]
    %v1517 = vld [vmem:[#allocation27 + $0x90] sm:$0xf]
    %v1518 = vld [vmem:[#allocation27 + $0x94] sm:$0xf]
    %v1519 = vld [vmem:[#allocation27 + $0x98] sm:$0xf]
    %v1520 = vld [vmem:[#allocation27 + $0x9c] sm:$0xf]
    %v1521 = vld [vmem:[#allocation27 + $0xa0] sm:$0xf]
    %v1522 = vld [vmem:[#allocation27 + $0xa4] sm:$0xf]
    %v1523 = vld [vmem:[#allocation27 + $0xa8] sm:$0xf]
    %v1524 = vld [vmem:[#allocation27 + $0xac] sm:$0xf]
    %v1525 = vld [vmem:[#allocation27 + $0xb0] sm:$0xf]
    %v1526 = vld [vmem:[#allocation27 + $0xb4] sm:$0xf]
    %v1527 = vld [vmem:[#allocation27 + $0xb8] sm:$0xf]
    %v1528 = vld [vmem:[#allocation27 + $0xbc] sm:$0xf]
    %v1529 = vld [vmem:[#allocation27 + $0xc0] sm:$0xf]
    %v1530 = vld [vmem:[#allocation27 + $0xc4] sm:$0xf]
    %v1531 = vld [vmem:[#allocation27 + $0xc8] sm:$0xf]
    %v1532 = vld [vmem:[#allocation27 + $0xcc] sm:$0xf]
    %v1533 = vld [vmem:[#allocation27 + $0xd0] sm:$0xf]
    %v1534 = vld [vmem:[#allocation27 + $0xd4] sm:$0xf]
    %v1535 = vld [vmem:[#allocation27 + $0xd8] sm:$0xf]
    %v1536 = vld [vmem:[#allocation27 + $0xdc] sm:$0xf]
    %v1537 = vld [vmem:[#allocation27 + $0xe0] sm:$0xf]
    %v1538 = vld [vmem:[#allocation27 + $0xe4] sm:$0xf]
    %v1539 = vld [vmem:[#allocation27 + $0xe8] sm:$0xf]
    %v1540 = vld [vmem:[#allocation27 + $0xec] sm:$0xf]
    %v1541 = vld [vmem:[#allocation27 + $0xf0] sm:$0xf]
    %v1542 = vld [vmem:[#allocation27 + $0xf4] sm:$0xf]
    %v1543 = vld [vmem:[#allocation27 + $0xf8] sm:$0xf]
    %v1544 = vld [vmem:[#allocation27 + $0xfc] sm:$0xf]
    %v1546 = vlaneseq
    %v1547 = vshrl.u32 %v1546, 7
    %v1548 = vsub.s32 0, %v1547
    %v1549 = vrot.slane %v407, %v1548
    %v1615 = vunpack.c.l.b16 %v1481
    %v1616 = vunpack.c.l.b16 %v1482
    %v1617 = vunpack.c.l.b16 %v1483
    %v1618 = vunpack.c.l.b16 %v1484
    %v1619 = vunpack.c.l.b16 %v1485
    %v1620 = vunpack.c.l.b16 %v1486
    %v1621 = vunpack.c.l.b16 %v1487
    %v1622 = vunpack.c.l.b16 %v1488
    %v1623 = vunpack.c.l.b16 %v1489
    %v1624 = vunpack.c.l.b16 %v1490
    %v1625 = vunpack.c.l.b16 %v1491
    %v1626 = vunpack.c.l.b16 %v1492
    %v1627 = vunpack.c.l.b16 %v1493
    %v1628 = vunpack.c.l.b16 %v1494
    %v1629 = vunpack.c.l.b16 %v1495
    %v1630 = vunpack.c.l.b16 %v1496
    %v1631 = vunpack.c.l.b16 %v1497
    %v1632 = vunpack.c.l.b16 %v1498
    %v1633 = vunpack.c.l.b16 %v1499
    %v1634 = vunpack.c.l.b16 %v1500
    %v1635 = vunpack.c.l.b16 %v1501
    %v1636 = vunpack.c.l.b16 %v1502
    %v1637 = vunpack.c.l.b16 %v1503
    %v1638 = vunpack.c.l.b16 %v1504
    %v1639 = vunpack.c.l.b16 %v1505
    %v1640 = vunpack.c.l.b16 %v1506
    %v1641 = vunpack.c.l.b16 %v1507
    %v1642 = vunpack.c.l.b16 %v1508
    %v1643 = vunpack.c.l.b16 %v1509
    %v1644 = vunpack.c.l.b16 %v1510
    %v1645 = vunpack.c.l.b16 %v1511
    %v1646 = vunpack.c.l.b16 %v1512
    %v1647 = vunpack.c.l.b16 %v1513
    %v1648 = vunpack.c.l.b16 %v1514
    %v1649 = vunpack.c.l.b16 %v1515
    %v1650 = vunpack.c.l.b16 %v1516
    %v1651 = vunpack.c.l.b16 %v1517
    %v1652 = vunpack.c.l.b16 %v1518
    %v1653 = vunpack.c.l.b16 %v1519
    %v1654 = vunpack.c.l.b16 %v1520
    %v1655 = vunpack.c.l.b16 %v1521
    %v1656 = vunpack.c.l.b16 %v1522
    %v1657 = vunpack.c.l.b16 %v1523
    %v1658 = vunpack.c.l.b16 %v1524
    %v1659 = vunpack.c.l.b16 %v1525
    %v1660 = vunpack.c.l.b16 %v1526
    %v1661 = vunpack.c.l.b16 %v1527
    %v1662 = vunpack.c.l.b16 %v1528
    %v1663 = vunpack.c.l.b16 %v1529
    %v1664 = vunpack.c.l.b16 %v1530
    %v1665 = vunpack.c.l.b16 %v1531
    %v1666 = vunpack.c.l.b16 %v1532
    %v1667 = vunpack.c.l.b16 %v1533
    %v1668 = vunpack.c.l.b16 %v1534
    %v1669 = vunpack.c.l.b16 %v1535
    %v1670 = vunpack.c.l.b16 %v1536
    %v1671 = vunpack.c.l.b16 %v1537
    %v1672 = vunpack.c.l.b16 %v1538
    %v1673 = vunpack.c.l.b16 %v1539
    %v1674 = vunpack.c.l.b16 %v1540
    %v1675 = vunpack.c.l.b16 %v1541
    %v1676 = vunpack.c.l.b16 %v1542
    %v1677 = vunpack.c.l.b16 %v1543
    %v1678 = vunpack.c.l.b16 %v1544
    %v1679 = vpack.c.b16 %v1616, %v1615
    %v1680 = vpack.c.b16 %v1618, %v1617
    %v1681 = vpack.c.b16 %v1620, %v1619
    %v1682 = vpack.c.b16 %v1622, %v1621
    %v1683 = vpack.c.b16 %v1624, %v1623
    %v1684 = vpack.c.b16 %v1626, %v1625
    %v1685 = vpack.c.b16 %v1628, %v1627
    %v1686 = vpack.c.b16 %v1630, %v1629
    %v1687 = vpack.c.b16 %v1632, %v1631
    %v1688 = vpack.c.b16 %v1634, %v1633
    %v1689 = vpack.c.b16 %v1636, %v1635
    %v1690 = vpack.c.b16 %v1638, %v1637
    %v1691 = vpack.c.b16 %v1640, %v1639
    %v1692 = vpack.c.b16 %v1642, %v1641
    %v1693 = vpack.c.b16 %v1644, %v1643
    %v1694 = vpack.c.b16 %v1646, %v1645
    %v1695 = vpack.c.b16 %v1648, %v1647
    %v1696 = vpack.c.b16 %v1650, %v1649
    %v1697 = vpack.c.b16 %v1652, %v1651
    %v1698 = vpack.c.b16 %v1654, %v1653
    %v1699 = vpack.c.b16 %v1656, %v1655
    %v1700 = vpack.c.b16 %v1658, %v1657
    %v1701 = vpack.c.b16 %v1660, %v1659
    %v1702 = vpack.c.b16 %v1662, %v1661
    %v1703 = vpack.c.b16 %v1664, %v1663
    %v1704 = vpack.c.b16 %v1666, %v1665
    %v1705 = vpack.c.b16 %v1668, %v1667
    %v1706 = vpack.c.b16 %v1670, %v1669
    %v1707 = vpack.c.b16 %v1672, %v1671
    %v1708 = vpack.c.b16 %v1674, %v1673
    %v1709 = vpack.c.b16 %v1676, %v1675
    %v1710 = vpack.c.b16 %v1678, %v1677
    %1743 = vmatprep.subr.bf16.mxu0 0
    %1744 = vmatpush1.bf16.msra.mxu0 %v1686
    %1745 = vmatprep.subr.bf16.mxu0 0
    %1746 = vmatpush1.bf16.msra.mxu0 %v1685
    %1747 = vmatprep.subr.bf16.mxu0 0
    %1748 = vmatpush1.bf16.msra.mxu0 %v1684
    %1749 = vmatprep.subr.bf16.mxu0 0
    %1750 = vmatpush1.bf16.msra.mxu0 %v1683
    %1751 = vmatprep.subr.bf16.mxu0 0
    %1752 = vmatpush1.bf16.msra.mxu0 %v1682
    %1753 = vmatprep.subr.bf16.mxu0 0
    %1754 = vmatpush1.bf16.msra.mxu0 %v1681
    %1755 = vmatprep.subr.bf16.mxu0 0
    %1756 = vmatpush1.bf16.msra.mxu0 %v1680
    %1757 = vmatprep.subr.bf16.mxu0 0
    %1758 = vmatpush1.bf16.msra.mxu0 %v1679
    %1759 = vmatprep.subr.bf16.mxu0 0
    %1760 = vmatpush2.bf16.msra.mxu0 %v1694
    %1761 = vmatprep.subr.bf16.mxu0 0
    %1762 = vmatpush2.bf16.msra.mxu0 %v1693
    %1763 = vmatprep.subr.bf16.mxu0 0
    %1764 = vmatpush2.bf16.msra.mxu0 %v1692
    %1765 = vmatprep.subr.bf16.mxu0 0
    %1766 = vmatpush2.bf16.msra.mxu0 %v1691
    %1767 = vmatprep.subr.bf16.mxu0 0
    %1768 = vmatpush2.bf16.msra.mxu0 %v1690
    %1769 = vmatprep.subr.bf16.mxu0 0
    %1770 = vmatpush2.bf16.msra.mxu0 %v1689
    %1771 = vmatprep.subr.bf16.mxu0 0
    %1772 = vmatpush2.bf16.msra.mxu0 %v1688
    %1773 = vmatprep.subr.bf16.mxu0 0
    %1774 = vmatpush2.bf16.msra.mxu0 %v1687
    %1775 = vmatprep.mubr.bf16.mxu0 %v1466
    %1776 = vmatmul.mubr.bf16.gmra.mxu0 %v1465
    %v1777 = vpop.f32.mrf.mxu0
    %v1778 = vadd.f32 %v1549, %v1777
    %v1779 = vpop.f32.mrf.mxu0
    %v1780 = vpop.f32.mrf.mxu0
    %v1781 = vadd.f32 %v1549, %v1780
    %v1782 = vpop.f32.mrf.mxu0
    %1783 = vmatprep.mubr.bf16.mxu0 %v1470
    %1784 = vmatmul.mubr.bf16.gmra.mxu0 %v1469
    %v1785 = vpop.f32.mrf.mxu0
    %v1786 = vadd.f32 %v1549, %v1785
    %v1787 = vpop.f32.mrf.mxu0
    %v1788 = vpop.f32.mrf.mxu0
    %v1789 = vadd.f32 %v1549, %v1788
    %v1790 = vpop.f32.mrf.mxu0
    %1791 = vmatprep.mubr.bf16.mxu0 %v1474
    %1792 = vmatmul.mubr.bf16.gmra.mxu0 %v1473
    %v1793 = vpop.f32.mrf.mxu0
    %v1794 = vadd.f32 %v1549, %v1793
    %v1795 = vpop.f32.mrf.mxu0
    %v1796 = vpop.f32.mrf.mxu0
    %v1797 = vadd.f32 %v1549, %v1796
    %v1798 = vpop.f32.mrf.mxu0
    %1799 = vmatprep.mubr.bf16.mxu0 %v1478
    %1800 = vmatmul.mubr.bf16.gmra.mxu0 %v1477
    %v1801 = vpop.f32.mrf.mxu0
    %v1802 = vadd.f32 %v1549, %v1801
    %v1803 = vpop.f32.mrf.mxu0
    %v1804 = vpop.f32.mrf.mxu0
    %v1805 = vadd.f32 %v1549, %v1804
    %v1806 = vpop.f32.mrf.mxu0
    %1807 = vdwg.mxu0
    %1808 = vmatprep.subr.bf16.mxu0 0
    %1809 = vmatpush1.bf16.msra.mxu0 %v1702
    %1810 = vmatprep.subr.bf16.mxu0 0
    %1811 = vmatpush1.bf16.msra.mxu0 %v1701
    %1812 = vmatprep.subr.bf16.mxu0 0
    %1813 = vmatpush1.bf16.msra.mxu0 %v1700
    %1814 = vmatprep.subr.bf16.mxu0 0
    %1815 = vmatpush1.bf16.msra.mxu0 %v1699
    %1816 = vmatprep.subr.bf16.mxu0 0
    %1817 = vmatpush1.bf16.msra.mxu0 %v1698
    %1818 = vmatprep.subr.bf16.mxu0 0
    %1819 = vmatpush1.bf16.msra.mxu0 %v1697
    %1820 = vmatprep.subr.bf16.mxu0 0
    %1821 = vmatpush1.bf16.msra.mxu0 %v1696
    %1822 = vmatprep.subr.bf16.mxu0 0
    %1823 = vmatpush1.bf16.msra.mxu0 %v1695
    %1824 = vmatprep.subr.bf16.mxu0 0
    %1825 = vmatpush2.bf16.msra.mxu0 %v1710
    %1826 = vmatprep.subr.bf16.mxu0 0
    %1827 = vmatpush2.bf16.msra.mxu0 %v1709
    %1828 = vmatprep.subr.bf16.mxu0 0
    %1829 = vmatpush2.bf16.msra.mxu0 %v1708
    %1830 = vmatprep.subr.bf16.mxu0 0
    %1831 = vmatpush2.bf16.msra.mxu0 %v1707
    %1832 = vmatprep.subr.bf16.mxu0 0
    %1833 = vmatpush2.bf16.msra.mxu0 %v1706
    %1834 = vmatprep.subr.bf16.mxu0 0
    %1835 = vmatpush2.bf16.msra.mxu0 %v1705
    %1836 = vmatprep.subr.bf16.mxu0 0
    %1837 = vmatpush2.bf16.msra.mxu0 %v1704
    %1838 = vmatprep.subr.bf16.mxu0 0
    %1839 = vmatpush2.bf16.msra.mxu0 %v1703
    %1840 = vmatprep.mubr.bf16.mxu0 %v1468
    %1841 = vmatmul.mubr.bf16.gmra.mxu0 %v1467
    %v1842 = vpop.f32.mrf.mxu0
    %v1843 = vadd.f32 %v1778, %v1842
    %v1844 = vpop.f32.mrf.mxu0
    %v1845 = vpop.f32.mrf.mxu0
    %v1846 = vadd.f32 %v1781, %v1845
    %v1847 = vpop.f32.mrf.mxu0
    %1848 = vmatprep.mubr.bf16.mxu0 %v1472
    %1849 = vmatmul.mubr.bf16.gmra.mxu0 %v1471
    %v1850 = vpop.f32.mrf.mxu0
    %v1851 = vadd.f32 %v1786, %v1850
    %v1852 = vpop.f32.mrf.mxu0
    %v1853 = vpop.f32.mrf.mxu0
    %v1854 = vadd.f32 %v1789, %v1853
    %v1855 = vpop.f32.mrf.mxu0
    %1856 = vmatprep.mubr.bf16.mxu0 %v1476
    %1857 = vmatmul.mubr.bf16.gmra.mxu0 %v1475
    %v1858 = vpop.f32.mrf.mxu0
    %v1859 = vadd.f32 %v1794, %v1858
    %v1860 = vpop.f32.mrf.mxu0
    %v1861 = vpop.f32.mrf.mxu0
    %v1862 = vadd.f32 %v1797, %v1861
    %v1863 = vpop.f32.mrf.mxu0
    %1864 = vmatprep.mubr.bf16.mxu0 %v1480
    %1865 = vmatmul.mubr.bf16.gmra.mxu0 %v1479
    %v1866 = vpop.f32.mrf.mxu0
    %v1867 = vadd.f32 %v1802, %v1866
    %v1868 = vpop.f32.mrf.mxu0
    %v1869 = vpop.f32.mrf.mxu0
    %v1870 = vadd.f32 %v1805, %v1869
    %v1871 = vpop.f32.mrf.mxu0
    %1872 = vdwg.mxu0
    %v1873 = vld [vmem:[#allocation28] sm:$0xf]
    %v1874 = vld [vmem:[#allocation28 + $0x4] sm:$0xf]
    %v1875 = vld [vmem:[#allocation28 + $0x8] sm:$0xf]
    %v1876 = vld [vmem:[#allocation28 + $0xc] sm:$0xf]
    %v1877 = vld [vmem:[#allocation28 + $0x10] sm:$0xf]
    %v1878 = vld [vmem:[#allocation28 + $0x14] sm:$0xf]
    %v1879 = vld [vmem:[#allocation28 + $0x18] sm:$0xf]
    %v1880 = vld [vmem:[#allocation28 + $0x1c] sm:$0xf]
    %v1881 = vld [vmem:[#allocation28 + $0x20] sm:$0xf]
    %v1882 = vld [vmem:[#allocation28 + $0x24] sm:$0xf]
    %v1883 = vld [vmem:[#allocation28 + $0x28] sm:$0xf]
    %v1884 = vld [vmem:[#allocation28 + $0x2c] sm:$0xf]
    %v1885 = vld [vmem:[#allocation28 + $0x30] sm:$0xf]
    %v1886 = vld [vmem:[#allocation28 + $0x34] sm:$0xf]
    %v1887 = vld [vmem:[#allocation28 + $0x38] sm:$0xf]
    %v1888 = vld [vmem:[#allocation28 + $0x3c] sm:$0xf]
    %s1889 = scalar_lea.vmem [#allocation28], 64
    %v1890 = vld [vmem:[%s1889] sm:$0xf]
    %v1891 = vld [vmem:[%s1889 + $0x4] sm:$0xf]
    %v1892 = vld [vmem:[%s1889 + $0x8] sm:$0xf]
    %v1893 = vld [vmem:[%s1889 + $0xc] sm:$0xf]
    %v1894 = vld [vmem:[%s1889 + $0x10] sm:$0xf]
    %v1895 = vld [vmem:[%s1889 + $0x14] sm:$0xf]
    %v1896 = vld [vmem:[%s1889 + $0x18] sm:$0xf]
    %v1897 = vld [vmem:[%s1889 + $0x1c] sm:$0xf]
    %v1898 = vld [vmem:[%s1889 + $0x20] sm:$0xf]
    %v1899 = vld [vmem:[%s1889 + $0x24] sm:$0xf]
    %v1900 = vld [vmem:[%s1889 + $0x28] sm:$0xf]
    %v1901 = vld [vmem:[%s1889 + $0x2c] sm:$0xf]
    %v1902 = vld [vmem:[%s1889 + $0x30] sm:$0xf]
    %v1903 = vld [vmem:[%s1889 + $0x34] sm:$0xf]
    %v1904 = vld [vmem:[%s1889 + $0x38] sm:$0xf]
    %v1905 = vld [vmem:[%s1889 + $0x3c] sm:$0xf]
    %v1906 = vlaneseq
    %v1907 = vand.u32 %v1906, 127
    %vm1908 = vcmp.ge.s32.totalorder %v1907, 64
    %vm1909 = vcmp.lt.s32.totalorder %v1907, 96
    %vm1910 = vmand %vm1908, %vm1909
    %v1911 = vsel %vm1910, 1.0, 0.5
    %v1912 = vsel %vm1910, 0.0, 0.5
    %v1913 = vld [vmem:[#allocation36] sm:$0xff]
    %s1914 = scalar_lea.vmem [#allocation36], 8
    %v1915 = vld [vmem:[%s1914] sm:$0xff]
    %v1916 = vpack.c.bf16 %v1913, %v1913
    %v1933 = vunpack.c.l.b16 %v1873
    %v1934 = vunpack.c.l.b16 %v1874
    %v1935 = vunpack.c.l.b16 %v1875
    %v1936 = vunpack.c.l.b16 %v1876
    %v1937 = vunpack.c.l.b16 %v1877
    %v1938 = vunpack.c.l.b16 %v1878
    %v1939 = vunpack.c.l.b16 %v1879
    %v1940 = vunpack.c.l.b16 %v1880
    %v1941 = vunpack.c.l.b16 %v1881
    %v1942 = vunpack.c.l.b16 %v1882
    %v1943 = vunpack.c.l.b16 %v1883
    %v1944 = vunpack.c.l.b16 %v1884
    %v1945 = vunpack.c.l.b16 %v1885
    %v1946 = vunpack.c.l.b16 %v1886
    %v1947 = vunpack.c.l.b16 %v1887
    %v1948 = vunpack.c.l.b16 %v1888
    %v1949 = vpack.c.b16 %v1934, %v1933
    %v1950 = vpack.c.b16 %v1936, %v1935
    %v1951 = vpack.c.b16 %v1938, %v1937
    %v1952 = vpack.c.b16 %v1940, %v1939
    %v1953 = vpack.c.b16 %v1942, %v1941
    %v1954 = vpack.c.b16 %v1944, %v1943
    %v1955 = vpack.c.b16 %v1946, %v1945
    %v1956 = vpack.c.b16 %v1948, %v1947
    %1965 = vmatprep.subr.bf16.mxu0 0
    %1966 = vmatpush1.bf16.msra.mxu0 %v1956
    %1967 = vmatprep.subr.bf16.mxu0 0
    %1968 = vmatpush1.bf16.msra.mxu0 %v1955
    %1969 = vmatprep.subr.bf16.mxu0 0
    %1970 = vmatpush1.bf16.msra.mxu0 %v1954
    %1971 = vmatprep.subr.bf16.mxu0 0
    %1972 = vmatpush1.bf16.msra.mxu0 %v1953
    %1973 = vmatprep.subr.bf16.mxu0 0
    %1974 = vmatpush1.bf16.msra.mxu0 %v1952
    %1975 = vmatprep.subr.bf16.mxu0 0
    %1976 = vmatpush1.bf16.msra.mxu0 %v1951
    %1977 = vmatprep.subr.bf16.mxu0 0
    %1978 = vmatpush1.bf16.msra.mxu0 %v1950
    %1979 = vmatprep.subr.bf16.mxu0 0
    %1980 = vmatpush1.bf16.msra.mxu0 %v1949
    %1981 = vmatprep.subr.bf16.mxu0 0
    %1982 = vmatpush2.bf16.msra.mxu0 0
    %1983 = vmatprep.subr.bf16.mxu0 0
    %1984 = vmatpush2.bf16.msra.mxu0 0
    %1985 = vmatprep.subr.bf16.mxu0 0
    %1986 = vmatpush2.bf16.msra.mxu0 0
    %1987 = vmatprep.subr.bf16.mxu0 0
    %1988 = vmatpush2.bf16.msra.mxu0 0
    %1989 = vmatprep.subr.bf16.mxu0 0
    %1990 = vmatpush2.bf16.msra.mxu0 0
    %1991 = vmatprep.subr.bf16.mxu0 0
    %1992 = vmatpush2.bf16.msra.mxu0 0
    %1993 = vmatprep.subr.bf16.mxu0 0
    %1994 = vmatpush2.bf16.msra.mxu0 0
    %1995 = vmatprep.subr.bf16.mxu0 0
    %1996 = vmatpush2.bf16.msra.mxu0 0
    %1997 = vmatprep.mubr.bf16.mxu0 0
    %1998 = vmatmul.mubr.bf16.gmra.mxu0 %v1916
    %v1999 = vpop.f32.mrf.mxu0
    %v2000 = vadd.f32 0.0, %v1999
    %v2001 = vpop.f32.mrf.mxu0
    %v2002 = vpop.f32.mrf.mxu0
    %v2003 = vpop.f32.mrf.mxu0
    %2004 = vdwg.mxu0
    %v2005 = vadd.f32 %v1843, %v2000
    %v2006 = vtanh.pop %v2005
    %v2007 = vmul.f32 %v2006, %v1911
    %v2008 = vadd.f32 %v2007, %v1912
    %2009 = vrot.lane.b32.xlu0 %v2008, 64
    %v2010 = vpop.permute.xlu0 %2009
    %v2011 = vmul.f32 %v2008, %v2010
    %2012 = vrot.lane.b32.xlu0 %v2008, 96
    %v2013 = vpop.permute.xlu0 %2012
    %2014 = vrot.lane.b32.xlu0 %v2008, 32
    %v2015 = vpop.permute.xlu0 %2014
    %v2016 = vmul.f32 %v2013, %v1915
    %v2017 = vadd.f32 %v2016, %v2011
    %v2018 = vtanh.pop %v2017
    %v2019 = vmul.f32 %v2015, %v2018
    %v2020 = vpack.c.bf16 %v2019, %v2019
    %2021 = vmatprep.subr.bf16.mxu0 0
    %2022 = vmatpush1.bf16.msra.mxu0 %v1956
    %2023 = vmatprep.subr.bf16.mxu0 0
    %2024 = vmatpush1.bf16.msra.mxu0 %v1955
    %2025 = vmatprep.subr.bf16.mxu0 0
    %2026 = vmatpush1.bf16.msra.mxu0 %v1954
    %2027 = vmatprep.subr.bf16.mxu0 0
    %2028 = vmatpush1.bf16.msra.mxu0 %v1953
    %2029 = vmatprep.subr.bf16.mxu0 0
    %2030 = vmatpush1.bf16.msra.mxu0 %v1952
    %2031 = vmatprep.subr.bf16.mxu0 0
    %2032 = vmatpush1.bf16.msra.mxu0 %v1951
    %2033 = vmatprep.subr.bf16.mxu0 0
    %2034 = vmatpush1.bf16.msra.mxu0 %v1950
    %2035 = vmatprep.subr.bf16.mxu0 0
    %2036 = vmatpush1.bf16.msra.mxu0 %v1949
    %2037 = vmatprep.subr.bf16.mxu0 0
    %2038 = vmatpush2.bf16.msra.mxu0 0
    %2039 = vmatprep.subr.bf16.mxu0 0
    %2040 = vmatpush2.bf16.msra.mxu0 0
    %2041 = vmatprep.subr.bf16.mxu0 0
    %2042 = vmatpush2.bf16.msra.mxu0 0
    %2043 = vmatprep.subr.bf16.mxu0 0
    %2044 = vmatpush2.bf16.msra.mxu0 0
    %2045 = vmatprep.subr.bf16.mxu0 0
    %2046 = vmatpush2.bf16.msra.mxu0 0
    %2047 = vmatprep.subr.bf16.mxu0 0
    %2048 = vmatpush2.bf16.msra.mxu0 0
    %2049 = vmatprep.subr.bf16.mxu0 0
    %2050 = vmatpush2.bf16.msra.mxu0 0
    %2051 = vmatprep.subr.bf16.mxu0 0
    %2052 = vmatpush2.bf16.msra.mxu0 0
    %2053 = vmatprep.mubr.bf16.mxu0 0
    %2054 = vmatmul.mubr.bf16.gmra.mxu0 %v2020
    %v2055 = vpop.f32.mrf.mxu0
    %v2056 = vadd.f32 0.0, %v2055
    %v2057 = vpop.f32.mrf.mxu0
    %v2058 = vpop.f32.mrf.mxu0
    %v2059 = vpop.f32.mrf.mxu0
    %2060 = vdwg.mxu0
    %v2061 = vadd.f32 %v1846, %v2056
    %v2062 = vtanh.pop %v2061
    %v2063 = vmul.f32 %v2062, %v1911
    %v2064 = vadd.f32 %v2063, %v1912
    %2065 = vrot.lane.b32.xlu0 %v2064, 64
    %v2066 = vpop.permute.xlu0 %2065
    %v2067 = vmul.f32 %v2064, %v2066
    %2068 = vrot.lane.b32.xlu0 %v2064, 96
    %v2069 = vpop.permute.xlu0 %2068
    %2070 = vrot.lane.b32.xlu0 %v2064, 32
    %v2071 = vpop.permute.xlu0 %2070
    %v2072 = vmul.f32 %v2069, %v2017
    %v2073 = vadd.f32 %v2072, %v2067
    %v2074 = vtanh.pop %v2073
    %v2075 = vmul.f32 %v2071, %v2074
    %v2076 = vpack.c.bf16 %v2075, %v2075
    %2077 = vmatprep.subr.bf16.mxu0 0
    %2078 = vmatpush1.bf16.msra.mxu0 %v1956
    %2079 = vmatprep.subr.bf16.mxu0 0
    %2080 = vmatpush1.bf16.msra.mxu0 %v1955
    %2081 = vmatprep.subr.bf16.mxu0 0
    %2082 = vmatpush1.bf16.msra.mxu0 %v1954
    %2083 = vmatprep.subr.bf16.mxu0 0
    %2084 = vmatpush1.bf16.msra.mxu0 %v1953
    %2085 = vmatprep.subr.bf16.mxu0 0
    %2086 = vmatpush1.bf16.msra.mxu0 %v1952
    %2087 = vmatprep.subr.bf16.mxu0 0
    %2088 = vmatpush1.bf16.msra.mxu0 %v1951
    %2089 = vmatprep.subr.bf16.mxu0 0
    %2090 = vmatpush1.bf16.msra.mxu0 %v1950
    %2091 = vmatprep.subr.bf16.mxu0 0
    %2092 = vmatpush1.bf16.msra.mxu0 %v1949
    %2093 = vmatprep.subr.bf16.mxu0 0
    %2094 = vmatpush2.bf16.msra.mxu0 0
    %2095 = vmatprep.subr.bf16.mxu0 0
    %2096 = vmatpush2.bf16.msra.mxu0 0
    %2097 = vmatprep.subr.bf16.mxu0 0
    %2098 = vmatpush2.bf16.msra.mxu0 0
    %2099 = vmatprep.subr.bf16.mxu0 0
    %2100 = vmatpush2.bf16.msra.mxu0 0
    %2101 = vmatprep.subr.bf16.mxu0 0
    %2102 = vmatpush2.bf16.msra.mxu0 0
    %2103 = vmatprep.subr.bf16.mxu0 0
    %2104 = vmatpush2.bf16.msra.mxu0 0
    %2105 = vmatprep.subr.bf16.mxu0 0
    %2106 = vmatpush2.bf16.msra.mxu0 0
    %2107 = vmatprep.subr.bf16.mxu0 0
    %2108 = vmatpush2.bf16.msra.mxu0 0
    %2109 = vmatprep.mubr.bf16.mxu0 0
    %2110 = vmatmul.mubr.bf16.gmra.mxu0 %v2076
    %v2111 = vpop.f32.mrf.mxu0
    %v2112 = vadd.f32 0.0, %v2111
    %v2113 = vpop.f32.mrf.mxu0
    %v2114 = vpop.f32.mrf.mxu0
    %v2115 = vpop.f32.mrf.mxu0
    %2116 = vdwg.mxu0
    %v2117 = vadd.f32 %v1851, %v2112
    %v2118 = vtanh.pop %v2117
    %v2119 = vmul.f32 %v2118, %v1911
    %v2120 = vadd.f32 %v2119, %v1912
    %2121 = vrot.lane.b32.xlu0 %v2120, 64
    %v2122 = vpop.permute.xlu0 %2121
    %v2123 = vmul.f32 %v2120, %v2122
    %2124 = vrot.lane.b32.xlu0 %v2120, 96
    %v2125 = vpop.permute.xlu0 %2124
    %2126 = vrot.lane.b32.xlu0 %v2120, 32
    %v2127 = vpop.permute.xlu0 %2126
    %v2128 = vmul.f32 %v2125, %v2073
    %v2129 = vadd.f32 %v2128, %v2123
    %v2130 = vtanh.pop %v2129
    %v2131 = vmul.f32 %v2127, %v2130
    %v2132 = vpack.c.bf16 %v2131, %v2131
    %2133 = vmatprep.subr.bf16.mxu0 0
    %2134 = vmatpush1.bf16.msra.mxu0 %v1956
    %2135 = vmatprep.subr.bf16.mxu0 0
    %2136 = vmatpush1.bf16.msra.mxu0 %v1955
    %2137 = vmatprep.subr.bf16.mxu0 0
    %2138 = vmatpush1.bf16.msra.mxu0 %v1954
    %2139 = vmatprep.subr.bf16.mxu0 0
    %2140 = vmatpush1.bf16.msra.mxu0 %v1953
    %2141 = vmatprep.subr.bf16.mxu0 0
    %2142 = vmatpush1.bf16.msra.mxu0 %v1952
    %2143 = vmatprep.subr.bf16.mxu0 0
    %2144 = vmatpush1.bf16.msra.mxu0 %v1951
    %2145 = vmatprep.subr.bf16.mxu0 0
    %2146 = vmatpush1.bf16.msra.mxu0 %v1950
    %2147 = vmatprep.subr.bf16.mxu0 0
    %2148 = vmatpush1.bf16.msra.mxu0 %v1949
    %2149 = vmatprep.subr.bf16.mxu0 0
    %2150 = vmatpush2.bf16.msra.mxu0 0
    %2151 = vmatprep.subr.bf16.mxu0 0
    %2152 = vmatpush2.bf16.msra.mxu0 0
    %2153 = vmatprep.subr.bf16.mxu0 0
    %2154 = vmatpush2.bf16.msra.mxu0 0
    %2155 = vmatprep.subr.bf16.mxu0 0
    %2156 = vmatpush2.bf16.msra.mxu0 0
    %2157 = vmatprep.subr.bf16.mxu0 0
    %2158 = vmatpush2.bf16.msra.mxu0 0
    %2159 = vmatprep.subr.bf16.mxu0 0
    %2160 = vmatpush2.bf16.msra.mxu0 0
    %2161 = vmatprep.subr.bf16.mxu0 0
    %2162 = vmatpush2.bf16.msra.mxu0 0
    %2163 = vmatprep.subr.bf16.mxu0 0
    %2164 = vmatpush2.bf16.msra.mxu0 0
    %2165 = vmatprep.mubr.bf16.mxu0 0
    %2166 = vmatmul.mubr.bf16.gmra.mxu0 %v2132
    %v2167 = vpop.f32.mrf.mxu0
    %v2168 = vadd.f32 0.0, %v2167
    %v2169 = vpop.f32.mrf.mxu0
    %v2170 = vpop.f32.mrf.mxu0
    %v2171 = vpop.f32.mrf.mxu0
    %2172 = vdwg.mxu0
    %v2173 = vadd.f32 %v1854, %v2168
    %v2174 = vtanh.pop %v2173
    %v2175 = vmul.f32 %v2174, %v1911
    %v2176 = vadd.f32 %v2175, %v1912
    %2177 = vrot.lane.b32.xlu0 %v2176, 64
    %v2178 = vpop.permute.xlu0 %2177
    %v2179 = vmul.f32 %v2176, %v2178
    %2180 = vrot.lane.b32.xlu0 %v2176, 96
    %v2181 = vpop.permute.xlu0 %2180
    %2182 = vrot.lane.b32.xlu0 %v2176, 32
    %v2183 = vpop.permute.xlu0 %2182
    %v2184 = vmul.f32 %v2181, %v2129
    %v2185 = vadd.f32 %v2184, %v2179
    %v2186 = vtanh.pop %v2185
    %v2187 = vmul.f32 %v2183, %v2186
    %v2188 = vpack.c.bf16 %v2187, %v2187
    %2189 = vmatprep.subr.bf16.mxu0 0
    %2190 = vmatpush1.bf16.msra.mxu0 %v1956
    %2191 = vmatprep.subr.bf16.mxu0 0
    %2192 = vmatpush1.bf16.msra.mxu0 %v1955
    %2193 = vmatprep.subr.bf16.mxu0 0
    %2194 = vmatpush1.bf16.msra.mxu0 %v1954
    %2195 = vmatprep.subr.bf16.mxu0 0
    %2196 = vmatpush1.bf16.msra.mxu0 %v1953
    %2197 = vmatprep.subr.bf16.mxu0 0
    %2198 = vmatpush1.bf16.msra.mxu0 %v1952
    %2199 = vmatprep.subr.bf16.mxu0 0
    %2200 = vmatpush1.bf16.msra.mxu0 %v1951
    %2201 = vmatprep.subr.bf16.mxu0 0
    %2202 = vmatpush1.bf16.msra.mxu0 %v1950
    %2203 = vmatprep.subr.bf16.mxu0 0
    %2204 = vmatpush1.bf16.msra.mxu0 %v1949
    %2205 = vmatprep.subr.bf16.mxu0 0
    %2206 = vmatpush2.bf16.msra.mxu0 0
    %2207 = vmatprep.subr.bf16.mxu0 0
    %2208 = vmatpush2.bf16.msra.mxu0 0
    %2209 = vmatprep.subr.bf16.mxu0 0
    %2210 = vmatpush2.bf16.msra.mxu0 0
    %2211 = vmatprep.subr.bf16.mxu0 0
    %2212 = vmatpush2.bf16.msra.mxu0 0
    %2213 = vmatprep.subr.bf16.mxu0 0
    %2214 = vmatpush2.bf16.msra.mxu0 0
    %2215 = vmatprep.subr.bf16.mxu0 0
    %2216 = vmatpush2.bf16.msra.mxu0 0
    %2217 = vmatprep.subr.bf16.mxu0 0
    %2218 = vmatpush2.bf16.msra.mxu0 0
    %2219 = vmatprep.subr.bf16.mxu0 0
    %2220 = vmatpush2.bf16.msra.mxu0 0
    %2221 = vmatprep.mubr.bf16.mxu0 0
    %2222 = vmatmul.mubr.bf16.gmra.mxu0 %v2188
    %v2223 = vpop.f32.mrf.mxu0
    %v2224 = vadd.f32 0.0, %v2223
    %v2225 = vpop.f32.mrf.mxu0
    %v2226 = vpop.f32.mrf.mxu0
    %v2227 = vpop.f32.mrf.mxu0
    %2228 = vdwg.mxu0
    %v2229 = vadd.f32 %v1859, %v2224
    %v2230 = vtanh.pop %v2229
    %v2231 = vmul.f32 %v2230, %v1911
    %v2232 = vadd.f32 %v2231, %v1912
    %2233 = vrot.lane.b32.xlu0 %v2232, 64
    %v2234 = vpop.permute.xlu0 %2233
    %v2235 = vmul.f32 %v2232, %v2234
    %2236 = vrot.lane.b32.xlu0 %v2232, 96
    %v2237 = vpop.permute.xlu0 %2236
    %2238 = vrot.lane.b32.xlu0 %v2232, 32
    %v2239 = vpop.permute.xlu0 %2238
    %v2240 = vmul.f32 %v2237, %v2185
    %v2241 = vadd.f32 %v2240, %v2235
    %v2242 = vtanh.pop %v2241
    %v2243 = vmul.f32 %v2239, %v2242
    %v2244 = vpack.c.bf16 %v2243, %v2243
    %2245 = vmatprep.subr.bf16.mxu0 0
    %2246 = vmatpush1.bf16.msra.mxu0 %v1956
    %2247 = vmatprep.subr.bf16.mxu0 0
    %2248 = vmatpush1.bf16.msra.mxu0 %v1955
    %2249 = vmatprep.subr.bf16.mxu0 0
    %2250 = vmatpush1.bf16.msra.mxu0 %v1954
    %2251 = vmatprep.subr.bf16.mxu0 0
    %2252 = vmatpush1.bf16.msra.mxu0 %v1953
    %2253 = vmatprep.subr.bf16.mxu0 0
    %2254 = vmatpush1.bf16.msra.mxu0 %v1952
    %2255 = vmatprep.subr.bf16.mxu0 0
    %2256 = vmatpush1.bf16.msra.mxu0 %v1951
    %2257 = vmatprep.subr.bf16.mxu0 0
    %2258 = vmatpush1.bf16.msra.mxu0 %v1950
    %2259 = vmatprep.subr.bf16.mxu0 0
    %2260 = vmatpush1.bf16.msra.mxu0 %v1949
    %2261 = vmatprep.subr.bf16.mxu0 0
    %2262 = vmatpush2.bf16.msra.mxu0 0
    %2263 = vmatprep.subr.bf16.mxu0 0
    %2264 = vmatpush2.bf16.msra.mxu0 0
    %2265 = vmatprep.subr.bf16.mxu0 0
    %2266 = vmatpush2.bf16.msra.mxu0 0
    %2267 = vmatprep.subr.bf16.mxu0 0
    %2268 = vmatpush2.bf16.msra.mxu0 0
    %2269 = vmatprep.subr.bf16.mxu0 0
    %2270 = vmatpush2.bf16.msra.mxu0 0
    %2271 = vmatprep.subr.bf16.mxu0 0
    %2272 = vmatpush2.bf16.msra.mxu0 0
    %2273 = vmatprep.subr.bf16.mxu0 0
    %2274 = vmatpush2.bf16.msra.mxu0 0
    %2275 = vmatprep.subr.bf16.mxu0 0
    %2276 = vmatpush2.bf16.msra.mxu0 0
    %2277 = vmatprep.mubr.bf16.mxu0 0
    %2278 = vmatmul.mubr.bf16.gmra.mxu0 %v2244
    %v2279 = vpop.f32.mrf.mxu0
    %v2280 = vadd.f32 0.0, %v2279
    %v2281 = vpop.f32.mrf.mxu0
    %v2282 = vpop.f32.mrf.mxu0
    %v2283 = vpop.f32.mrf.mxu0
    %2284 = vdwg.mxu0
    %v2285 = vadd.f32 %v1862, %v2280
    %v2286 = vtanh.pop %v2285
    %v2287 = vmul.f32 %v2286, %v1911
    %v2288 = vadd.f32 %v2287, %v1912
    %2289 = vrot.lane.b32.xlu0 %v2288, 64
    %v2290 = vpop.permute.xlu0 %2289
    %v2291 = vmul.f32 %v2288, %v2290
    %2292 = vrot.lane.b32.xlu0 %v2288, 96
    %v2293 = vpop.permute.xlu0 %2292
    %2294 = vrot.lane.b32.xlu0 %v2288, 32
    %v2295 = vpop.permute.xlu0 %2294
    %v2296 = vmul.f32 %v2293, %v2241
    %v2297 = vadd.f32 %v2296, %v2291
    %v2298 = vtanh.pop %v2297
    %v2299 = vmul.f32 %v2295, %v2298
    %v2300 = vpack.c.bf16 %v2299, %v2299
    %2301 = vmatprep.subr.bf16.mxu0 0
    %2302 = vmatpush1.bf16.msra.mxu0 %v1956
    %2303 = vmatprep.subr.bf16.mxu0 0
    %2304 = vmatpush1.bf16.msra.mxu0 %v1955
    %2305 = vmatprep.subr.bf16.mxu0 0
    %2306 = vmatpush1.bf16.msra.mxu0 %v1954
    %2307 = vmatprep.subr.bf16.mxu0 0
    %2308 = vmatpush1.bf16.msra.mxu0 %v1953
    %2309 = vmatprep.subr.bf16.mxu0 0
    %2310 = vmatpush1.bf16.msra.mxu0 %v1952
    %2311 = vmatprep.subr.bf16.mxu0 0
    %2312 = vmatpush1.bf16.msra.mxu0 %v1951
    %2313 = vmatprep.subr.bf16.mxu0 0
    %2314 = vmatpush1.bf16.msra.mxu0 %v1950
    %2315 = vmatprep.subr.bf16.mxu0 0
    %2316 = vmatpush1.bf16.msra.mxu0 %v1949
    %2317 = vmatprep.subr.bf16.mxu0 0
    %2318 = vmatpush2.bf16.msra.mxu0 0
    %2319 = vmatprep.subr.bf16.mxu0 0
    %2320 = vmatpush2.bf16.msra.mxu0 0
    %2321 = vmatprep.subr.bf16.mxu0 0
    %2322 = vmatpush2.bf16.msra.mxu0 0
    %2323 = vmatprep.subr.bf16.mxu0 0
    %2324 = vmatpush2.bf16.msra.mxu0 0
    %2325 = vmatprep.subr.bf16.mxu0 0
    %2326 = vmatpush2.bf16.msra.mxu0 0
    %2327 = vmatprep.subr.bf16.mxu0 0
    %2328 = vmatpush2.bf16.msra.mxu0 0
    %2329 = vmatprep.subr.bf16.mxu0 0
    %2330 = vmatpush2.bf16.msra.mxu0 0
    %2331 = vmatprep.subr.bf16.mxu0 0
    %2332 = vmatpush2.bf16.msra.mxu0 0
    %2333 = vmatprep.mubr.bf16.mxu0 0
    %2334 = vmatmul.mubr.bf16.gmra.mxu0 %v2300
    %v2335 = vpop.f32.mrf.mxu0
    %v2336 = vadd.f32 0.0, %v2335
    %v2337 = vpop.f32.mrf.mxu0
    %v2338 = vpop.f32.mrf.mxu0
    %v2339 = vpop.f32.mrf.mxu0
    %2340 = vdwg.mxu0
    %v2341 = vadd.f32 %v1867, %v2336
    %v2342 = vtanh.pop %v2341
    %v2343 = vmul.f32 %v2342, %v1911
    %v2344 = vadd.f32 %v2343, %v1912
    %2345 = vrot.lane.b32.xlu0 %v2344, 64
    %v2346 = vpop.permute.xlu0 %2345
    %v2347 = vmul.f32 %v2344, %v2346
    %2348 = vrot.lane.b32.xlu0 %v2344, 96
    %v2349 = vpop.permute.xlu0 %2348
    %2350 = vrot.lane.b32.xlu0 %v2344, 32
    %v2351 = vpop.permute.xlu0 %2350
    %v2352 = vmul.f32 %v2349, %v2297
    %v2353 = vadd.f32 %v2352, %v2347
    %v2354 = vtanh.pop %v2353
    %v2355 = vmul.f32 %v2351, %v2354
    %v2356 = vpack.c.bf16 %v2355, %v2355
    %2357 = vmatprep.subr.bf16.mxu0 0
    %2358 = vmatpush1.bf16.msra.mxu0 %v1956
    %2359 = vmatprep.subr.bf16.mxu0 0
    %2360 = vmatpush1.bf16.msra.mxu0 %v1955
    %2361 = vmatprep.subr.bf16.mxu0 0
    %2362 = vmatpush1.bf16.msra.mxu0 %v1954
    %2363 = vmatprep.subr.bf16.mxu0 0
    %2364 = vmatpush1.bf16.msra.mxu0 %v1953
    %2365 = vmatprep.subr.bf16.mxu0 0
    %2366 = vmatpush1.bf16.msra.mxu0 %v1952
    %2367 = vmatprep.subr.bf16.mxu0 0
    %2368 = vmatpush1.bf16.msra.mxu0 %v1951
    %2369 = vmatprep.subr.bf16.mxu0 0
    %2370 = vmatpush1.bf16.msra.mxu0 %v1950
    %2371 = vmatprep.subr.bf16.mxu0 0
    %2372 = vmatpush1.bf16.msra.mxu0 %v1949
    %2373 = vmatprep.subr.bf16.mxu0 0
    %2374 = vmatpush2.bf16.msra.mxu0 0
    %2375 = vmatprep.subr.bf16.mxu0 0
    %2376 = vmatpush2.bf16.msra.mxu0 0
    %2377 = vmatprep.subr.bf16.mxu0 0
    %2378 = vmatpush2.bf16.msra.mxu0 0
    %2379 = vmatprep.subr.bf16.mxu0 0
    %2380 = vmatpush2.bf16.msra.mxu0 0
    %2381 = vmatprep.subr.bf16.mxu0 0
    %2382 = vmatpush2.bf16.msra.mxu0 0
    %2383 = vmatprep.subr.bf16.mxu0 0
    %2384 = vmatpush2.bf16.msra.mxu0 0
    %2385 = vmatprep.subr.bf16.mxu0 0
    %2386 = vmatpush2.bf16.msra.mxu0 0
    %2387 = vmatprep.subr.bf16.mxu0 0
    %2388 = vmatpush2.bf16.msra.mxu0 0
    %2389 = vmatprep.mubr.bf16.mxu0 0
    %2390 = vmatmul.mubr.bf16.gmra.mxu0 %v2356
    %v2391 = vpop.f32.mrf.mxu0
    %v2392 = vadd.f32 0.0, %v2391
    %v2393 = vpop.f32.mrf.mxu0
    %v2394 = vpop.f32.mrf.mxu0
    %v2395 = vpop.f32.mrf.mxu0
    %2396 = vdwg.mxu0
    %v2397 = vadd.f32 %v1870, %v2392
    %v2398 = vtanh.pop %v2397
    %v2399 = vmul.f32 %v2398, %v1911
    %v2400 = vadd.f32 %v2399, %v1912
    %2401 = vrot.lane.b32.xlu0 %v2400, 64
    %v2402 = vpop.permute.xlu0 %2401
    %v2403 = vmul.f32 %v2400, %v2402
    %2404 = vrot.lane.b32.xlu0 %v2400, 96
    %v2405 = vpop.permute.xlu0 %2404
    %2406 = vrot.lane.b32.xlu0 %v2400, 32
    %v2407 = vpop.permute.xlu0 %2406
    %v2408 = vmul.f32 %v2405, %v2353
    %v2409 = vadd.f32 %v2408, %v2403
    %v2410 = vtanh.pop %v2409
    %v2411 = vmul.f32 %v2407, %v2410
    %v2412 = vpack.c.bf16 %v2411, %v2411
    %v2414 = vlaneseq
    %v2415 = vshrl.u32 %v2414, 7
    %v2416 = vsub.s32 0, %v2415
    %v2417 = vrot.slane %v408, %v2416
    %v2435 = vunpack.c.l.b16 %v1890
    %v2436 = vunpack.c.l.b16 %v1891
    %v2437 = vunpack.c.l.b16 %v1892
    %v2438 = vunpack.c.l.b16 %v1893
    %v2439 = vunpack.c.l.b16 %v1894
    %v2440 = vunpack.c.l.b16 %v1895
    %v2441 = vunpack.c.l.b16 %v1896
    %v2442 = vunpack.c.l.b16 %v1897
    %v2443 = vunpack.c.l.b16 %v1898
    %v2444 = vunpack.c.l.b16 %v1899
    %v2445 = vunpack.c.l.b16 %v1900
    %v2446 = vunpack.c.l.b16 %v1901
    %v2447 = vunpack.c.l.b16 %v1902
    %v2448 = vunpack.c.l.b16 %v1903
    %v2449 = vunpack.c.l.b16 %v1904
    %v2450 = vunpack.c.l.b16 %v1905
    %v2451 = vpack.c.b16 %v2436, %v2435
    %v2452 = vpack.c.b16 %v2438, %v2437
    %v2453 = vpack.c.b16 %v2440, %v2439
    %v2454 = vpack.c.b16 %v2442, %v2441
    %v2455 = vpack.c.b16 %v2444, %v2443
    %v2456 = vpack.c.b16 %v2446, %v2445
    %v2457 = vpack.c.b16 %v2448, %v2447
    %v2458 = vpack.c.b16 %v2450, %v2449
    %2467 = vmatprep.subr.bf16.mxu0 0
    %2468 = vmatpush1.bf16.msra.mxu0 %v2458
    %2469 = vmatprep.subr.bf16.mxu0 0
    %2470 = vmatpush1.bf16.msra.mxu0 %v2457
    %2471 = vmatprep.subr.bf16.mxu0 0
    %2472 = vmatpush1.bf16.msra.mxu0 %v2456
    %2473 = vmatprep.subr.bf16.mxu0 0
    %2474 = vmatpush1.bf16.msra.mxu0 %v2455
    %2475 = vmatprep.subr.bf16.mxu0 0
    %2476 = vmatpush1.bf16.msra.mxu0 %v2454
    %2477 = vmatprep.subr.bf16.mxu0 0
    %2478 = vmatpush1.bf16.msra.mxu0 %v2453
    %2479 = vmatprep.subr.bf16.mxu0 0
    %2480 = vmatpush1.bf16.msra.mxu0 %v2452
    %2481 = vmatprep.subr.bf16.mxu0 0
    %2482 = vmatpush1.bf16.msra.mxu0 %v2451
    %2483 = vmatprep.subr.bf16.mxu0 0
    %2484 = vmatpush2.bf16.msra.mxu0 0
    %2485 = vmatprep.subr.bf16.mxu0 0
    %2486 = vmatpush2.bf16.msra.mxu0 0
    %2487 = vmatprep.subr.bf16.mxu0 0
    %2488 = vmatpush2.bf16.msra.mxu0 0
    %2489 = vmatprep.subr.bf16.mxu0 0
    %2490 = vmatpush2.bf16.msra.mxu0 0
    %2491 = vmatprep.subr.bf16.mxu0 0
    %2492 = vmatpush2.bf16.msra.mxu0 0
    %2493 = vmatprep.subr.bf16.mxu0 0
    %2494 = vmatpush2.bf16.msra.mxu0 0
    %2495 = vmatprep.subr.bf16.mxu0 0
    %2496 = vmatpush2.bf16.msra.mxu0 0
    %2497 = vmatprep.subr.bf16.mxu0 0
    %2498 = vmatpush2.bf16.msra.mxu0 0
    %2499 = vmatprep.mubr.bf16.mxu0 0
    %2500 = vmatmul.mubr.bf16.gmra.mxu0 %v2412
    %v2501 = vpop.f32.mrf.mxu0
    %v2502 = vadd.f32 %v2417, %v2501
    %v2503 = vpop.f32.mrf.mxu0
    %v2504 = vpop.f32.mrf.mxu0
    %v2505 = vpop.f32.mrf.mxu0
    %2506 = vdwg.mxu0
    %vm2507 = vcmask 58368
    %v2508 = vsel %vm2507, %v2502, 0.0
    %2509 = vadd.xlane.f32.xlu0 %v2508
    %v2510 = vpop.xlane.xlu0 %2509
    %v2511 = vrcp.pop 8.0
    %v2512 = vmul.f32 %v2510, %v2511
    %v2513 = vsub.f32 %v2502, %v2512
    %2515 = vset.pattern.permute.xlu0 8
    %2516 = vperm.xlu0 %2515, %v2502
    %v2517 = vpop.permute.xlu0 %2516
    %v2519 = vadd.f32 %v2517, %v2513
    %2520 = vst.msk [vmem:[#allocation30] sm:$0x3] %vm2507, %v2519
    %vm2521 = vcmask 254976
    %2522 = vst.msk [vmem:[#allocation31] sm:$0x3] %vm2521, %v2411
    %2523 = vst.msk [vmem:[#allocation33] sm:$0x3] %vm2521, %v2409
    // Predicated region
    $region62: #{q_net_forward.2} parent=1 // pred_check
      _
    $region63: #{q_net_forward.2} parent=1 // pred_check_branch
      %2525 = sbr.rel (0) target = $region65
    $region64: #{q_net_forward.2} parent=1 // pred_region
      %s2527 = ssub.s32 32, 32
      %2528 = vsyncadd [#allocation24], %s2527
      %s2530 = sshll.u32 [#allocation30], 4
      %s2531 = int_to_ptr.vmem [resolvable:$true] %s2530
      %2533 = dma.vmem_to_hbm [thread:$0]  %s2531, 32, %s13, [#allocation24]
    $region65: #{q_net_forward.2} parent=1 // pred_fallthru
      _
    // Predicated region
    $region66: #{q_net_forward.2} parent=1 // pred_check
      _
    $region67: #{q_net_forward.2} parent=1 // pred_check_branch
      %2535 = sbr.rel (0) target = $region69
    $region68: #{q_net_forward.2} parent=1 // pred_region
      %s2537 = ssub.s32 32, 32
      %2538 = vsyncadd [#allocation32], %s2537
      %s2540 = sshll.u32 [#allocation31], 4
      %s2541 = int_to_ptr.vmem [resolvable:$true] %s2540
      %2543 = dma.vmem_to_hbm [thread:$0]  %s2541, 32, %s14, [#allocation32]
    $region69: #{q_net_forward.2} parent=1 // pred_fallthru
      _
    // Predicated region
    $region70: #{q_net_forward.2} parent=1 // pred_check
      _
    $region71: #{q_net_forward.2} parent=1 // pred_check_branch
      %2545 = sbr.rel (0) target = $region73
    $region72: #{q_net_forward.2} parent=1 // pred_region
      %s2547 = ssub.s32 32, 32
      %2548 = vsyncadd [#allocation32], %s2547
      %s2550 = sshll.u32 [#allocation33], 4
      %s2551 = int_to_ptr.vmem [resolvable:$true] %s2550
      %2553 = dma.vmem_to_hbm [thread:$0]  %s2551, 32, %s15, [#allocation32]
    $region73: #{q_net_forward.2} parent=1 // pred_fallthru
      _
    // Predicated region
    $region74: #{q_net_forward.2} parent=1 // pred_check
      _
    $region75: #{q_net_forward.2} parent=1 // pred_check_branch
      %2555 = sbr.rel (0) target = $region77
    $region76: #{q_net_forward.2} parent=1 // pred_region
      %2556 = dma.done [#allocation24], 32
    $region77: #{q_net_forward.2} parent=1 // pred_fallthru
      _
    // Predicated region
    $region78: #{q_net_forward.2} parent=1 // pred_check
      _
    $region79: #{q_net_forward.2} parent=1 // pred_check_branch
      %2558 = sbr.rel (0) target = $region81
    $region80: #{q_net_forward.2} parent=1 // pred_region
      %2559 = dma.done [#allocation32], 32
    $region81: #{q_net_forward.2} parent=1 // pred_fallthru
      _
    // Predicated region
    $region82: #{q_net_forward.2} parent=1 // pred_check
      _
    $region83: #{q_net_forward.2} parent=1 // pred_check_branch
      %2561 = sbr.rel (0) target = $region85
    $region84: #{q_net_forward.2} parent=1 // pred_region
      %2562 = dma.done [#allocation32], 32
    $region85: #{q_net_forward.2} parent=1 // pred_fallthru
      _
    %2563 = vsyncpa [#allocation23], 1
    %2564 = vsyncpa [#allocation26], 1
    %2565 = vsyncpa [#allocation29], 1
    %2566 = vsyncpa [#allocation24], 1
    %2567 = vsyncpa [#allocation32], 1

</llo_original>
